<compile_context>
chip_gen: v6e
topology: v6e:2x2x1
jax: 0.10.0
libtpu: 0.0.40
codegen_flags: <defaults>
</compile_context>

<pallas_src>
import functools

import jax
import jax.numpy as jnp
from jax.experimental import pallas as pl
from jax.experimental.pallas import tpu as pltpu


def _attnmil_kernel(x_ref, w_red_ref, wvu_ref, bvu_ref, ww_t_ref, bw_ref,
                    wc_ref, bc_ref,
                    out_ref, a_raw_ref,
                    m_sc, l_sc, acc_sc,
                    *, n_valid, d_att, tile_n):
    i = pl.program_id(0)

    @pl.when(i == 0)
    def _init():
        m_sc[...] = jnp.full_like(m_sc, -jnp.inf)
        l_sc[...] = jnp.zeros_like(l_sc)
        acc_sc[...] = jnp.zeros_like(acc_sc)

    # DimReduction: Linear (no bias) + ReLU.  bf16 operands, f32 accumulation on the MXU.
    h = jnp.maximum(
        jnp.dot(x_ref[...], w_red_ref[...], preferred_element_type=jnp.float32), 0.0)   # [T, D_inner]
    h_bf = h.astype(jnp.bfloat16)

    # Fused gated-attention projections: one matmul covers both the V (tanh) and U (sigmoid) branch.
    g = jnp.dot(h_bf, wvu_ref[...], preferred_element_type=jnp.float32) + bvu_ref[...]   # [T, 2*D_att]
    gated = jnp.tanh(g[:, :d_att]) * jax.nn.sigmoid(g[:, d_att:])                        # [T, D_att]

    # Attention scores directly in lane-dense [K, T] layout:  (gated @ Ww)^T == Ww^T @ gated^T.
    a_t = jax.lax.dot_general(ww_t_ref[...], gated, (((1,), (1,)), ((), ())),
                              preferred_element_type=jnp.float32) + bw_ref[...]          # [K, T]
    a_raw_ref[...] = a_t                                                                 # pre-softmax scores

    # Mask padded patch columns (only the ragged last tile) out of the softmax.
    col = i * tile_n + jax.lax.broadcasted_iota(jnp.int32, a_t.shape, 1)
    a_m = jnp.where(col < n_valid, a_t, -jnp.inf)

    # Online softmax over patches + streaming attention pooling.
    m_prev = m_sc[...]
    m_new = jnp.maximum(m_prev, jnp.max(a_m, axis=1, keepdims=True))                     # [K, 1]
    alpha = jnp.exp(m_prev - m_new)
    p = jnp.exp(a_m - m_new)                                                             # [K, T]
    l_sc[...] = alpha * l_sc[...] + jnp.sum(p, axis=1, keepdims=True)
    acc_sc[...] = alpha * acc_sc[...] + jnp.dot(
        p.astype(jnp.bfloat16), h_bf, preferred_element_type=jnp.float32)                # [K, D_inner]
    m_sc[...] = m_new

    @pl.when(i == pl.num_programs(0) - 1)
    def _finalize():
        afeat = acc_sc[...] / l_sc[...]                                                  # [K, D_inner]
        out_ref[...] = (jnp.dot(afeat, wc_ref[...], preferred_element_type=jnp.float32)
                        + bc_ref[...])                                                   # [K, n_class]


def attnmil_forward(x, params, *, tile_n=128):
    """x: [1, N, D_feat] f32.  Returns (outputs [K, n_class], A_out [1, K, N])."""
    xs = x[0]
    N, D_feat = xs.shape
    D_inner = params["w_red"].shape[1]
    D_att = params["wv"].shape[1]
    K = params["ww"].shape[1]
    n_class = params["wc"].shape[1]

    num_tiles = pl.cdiv(N, tile_n)
    n_pad = num_tiles * tile_n

    # bf16 on the HBM-heavy stream and the big resident weights; pad bag to whole tiles.
    x_bf = jnp.pad(xs, ((0, n_pad - N), (0, 0))).astype(jnp.bfloat16)
    w_red_bf = params["w_red"].astype(jnp.bfloat16)
    wvu_bf = jnp.concatenate([params["wv"], params["wu"]], axis=1).astype(jnp.bfloat16)
    bvu = jnp.concatenate([params["bv"], params["bu"]], axis=1)
    ww_t = params["ww"].T          # [K, D_att]
    bw_c = params["bw"].T          # [K, 1]

    kernel = functools.partial(_attnmil_kernel, n_valid=N, d_att=D_att, tile_n=tile_n)

    grid_spec = pltpu.PrefetchScalarGridSpec(
        num_scalar_prefetch=0,
        grid=(num_tiles,),
        in_specs=[
            pl.BlockSpec((tile_n, D_feat), lambda i: (i, 0)),        # x: streamed per tile
            pl.BlockSpec((D_feat, D_inner), lambda i: (0, 0)),       # w_red: VMEM-resident
            pl.BlockSpec((D_inner, 2 * D_att), lambda i: (0, 0)),    # fused Wv|Wu: resident
            pl.BlockSpec((1, 2 * D_att), lambda i: (0, 0)),          # fused bv|bu
            pl.BlockSpec((K, D_att), lambda i: (0, 0)),              # Ww^T
            pl.BlockSpec((K, 1), lambda i: (0, 0)),                  # bw
            pl.BlockSpec((D_inner, n_class), lambda i: (0, 0)),      # classifier W
            pl.BlockSpec((1, n_class), lambda i: (0, 0)),            # classifier b
        ],
        out_specs=(
            pl.BlockSpec((K, n_class), lambda i: (0, 0)),            # outputs (written last step)
            pl.BlockSpec((K, tile_n), lambda i: (0, i)),             # A raw, lane-dense [K, N]
        ),
        scratch_shapes=[
            pltpu.VMEM((K, 1), jnp.float32),        # running max
            pltpu.VMEM((K, 1), jnp.float32),        # running denominator
            pltpu.VMEM((K, D_inner), jnp.float32),  # unnormalized pooled feature
        ],
    )

    outputs, a_raw = pl.pallas_call(
        kernel,
        grid_spec=grid_spec,
        out_shape=(jax.ShapeDtypeStruct((K, n_class), jnp.float32),
                   jax.ShapeDtypeStruct((K, n_pad), jnp.float32)),
        compiler_params=pltpu.CompilerParams(
            dimension_semantics=("arbitrary",),     # softmax reduction spans the whole N axis
            vmem_limit_bytes=48 * 1024 * 1024,      # > default, under v7x's 64 MiB physical VMEM
        ),
    )(x_bf, w_red_bf, wvu_bf, bvu, ww_t, bw_c, params["wc"], params["bc"])

    return outputs, a_raw[:, :N][None]              # ([K, n_class], [1, K, N])


def init_params(key, D_feat, D_inner, D_att, K, n_class):
    ks = jax.random.split(key, 9)
    s = 0.05
    return {
        "w_red": s * jax.random.normal(ks[0], (D_feat, D_inner), jnp.float32),
        "wv":    s * jax.random.normal(ks[1], (D_inner, D_att), jnp.float32),
        "bv":    s * jax.random.normal(ks[2], (1, D_att), jnp.float32),
        "wu":    s * jax.random.normal(ks[3], (D_inner, D_att), jnp.float32),
        "bu":    s * jax.random.normal(ks[4], (1, D_att), jnp.float32),
        "ww":    s * jax.random.normal(ks[5], (D_att, K), jnp.float32),
        "bw":    s * jax.random.normal(ks[6], (1, K), jnp.float32),
        "wc":    s * jax.random.normal(ks[7], (D_inner, n_class), jnp.float32),
        "bc":    s * jax.random.normal(ks[8], (1, n_class), jnp.float32),
    }


def reference_forward(x, p):
    """Pure-JAX f32 reference matching the PyTorch module."""
    xs = x[0]
    h = jnp.maximum(xs @ p["w_red"], 0.0)
    av = jnp.tanh(h @ p["wv"] + p["bv"])
    au = jax.nn.sigmoid(h @ p["wu"] + p["bu"])
    A = (av * au) @ p["ww"] + p["bw"]          # [N, K]
    At = A.T                                   # [K, N]
    Asm = jax.nn.softmax(At, axis=1)
    afeat = Asm @ h                            # [K, D_inner]
    outs = afeat @ p["wc"] + p["bc"]           # [K, n_class]
    return outs, At[None]


if __name__ == "__main__":
    # Small config: conf.feat_d=256, conf.D_inner=128, attention D=128 (module default),
    # K=1 token, conf.n_class=4; bag of N=300 patches (ragged last tile exercises masking).
    D_feat, D_inner, D_att, K, n_class = 256, 128, 128, 1, 4
    N = 300

    key = jax.random.PRNGKey(0)
    kx, kp = jax.random.split(key)
    x = jax.random.normal(kx, (1, N, D_feat), jnp.float32)
    params = init_params(kp, D_feat, D_inner, D_att, K, n_class)

    outputs, A_out = attnmil_forward(x, params)
    jax.block_until_ready((outputs, A_out))

    # sanity check against a pure-JAX f32 reference (kernel matmuls run in bf16 -> looser tol)
    ro, ra = reference_forward(x, params)
    assert outputs.shape == (K, n_class) and A_out.shape == (1, K, N)
    assert jnp.allclose(outputs, ro, atol=2e-2, rtol=2e-2), float(jnp.max(jnp.abs(outputs - ro)))
    assert jnp.allclose(A_out, ra, atol=2e-2, rtol=2e-2), float(jnp.max(jnp.abs(A_out - ra)))

    print("KERNEL_OK")
</pallas_src>

<mosaic_0001>
module attributes {stable_mosaic.version = 11 : i64} {
  func.func @_attnmil_kernel(%arg0: i32, %arg1: memref<128x256xbf16, #tpu.memory_space<vmem>>, %arg2: memref<256x128xbf16, #tpu.memory_space<vmem>>, %arg3: memref<128x256xbf16, #tpu.memory_space<vmem>>, %arg4: memref<1x256xf32, #tpu.memory_space<vmem>>, %arg5: memref<1x128xf32, #tpu.memory_space<vmem>>, %arg6: memref<1x1xf32, #tpu.memory_space<vmem>>, %arg7: memref<128x4xf32, #tpu.memory_space<vmem>>, %arg8: memref<1x4xf32, #tpu.memory_space<vmem>>, %arg9: memref<1x4xf32, #tpu.memory_space<vmem>>, %arg10: memref<1x128xf32, #tpu.memory_space<vmem>>, %arg11: memref<1x1xf32, #tpu.memory_space<vmem>>, %arg12: memref<1x1xf32, #tpu.memory_space<vmem>>, %arg13: memref<1x128xf32, #tpu.memory_space<vmem>>) attributes {dimension_semantics = [#tpu.dimension_semantics<arbitrary>], iteration_bounds = array<i64: 3>, scalar_prefetch = 0 : i64, scratch_operands = 3 : i64, tpu.core_type = #tpu.core_type<tc>, window_params = [{transform_indices = @transform_0, window_bounds = array<i64: 128, 256>}, {pipeline_mode = #tpu.pipeline_mode<synchronous>, transform_indices = @transform_1, window_bounds = array<i64: 256, 128>}, {pipeline_mode = #tpu.pipeline_mode<synchronous>, transform_indices = @transform_2, window_bounds = array<i64: 128, 256>}, {pipeline_mode = #tpu.pipeline_mode<synchronous>, transform_indices = @transform_3, window_bounds = array<i64: 1, 256>}, {pipeline_mode = #tpu.pipeline_mode<synchronous>, transform_indices = @transform_4, window_bounds = array<i64: 1, 128>}, {pipeline_mode = #tpu.pipeline_mode<synchronous>, transform_indices = @transform_5, window_bounds = array<i64: 1, 1>}, {pipeline_mode = #tpu.pipeline_mode<synchronous>, transform_indices = @transform_6, window_bounds = array<i64: 128, 4>}, {pipeline_mode = #tpu.pipeline_mode<synchronous>, transform_indices = @transform_7, window_bounds = array<i64: 1, 4>}, {pipeline_mode = #tpu.pipeline_mode<synchronous>, transform_indices = @transform_8, window_bounds = array<i64: 1, 4>}, {transform_indices = @transform_9, window_bounds = array<i64: 1, 128>}]} {
    %c0_i32 = arith.constant 0 : i32
    %0 = arith.cmpi eq, %arg0, %c0_i32 : i32
    %1 = arith.extui %0 : i1 to i32
    %c0_i32_0 = arith.constant 0 : i32
    %2 = arith.cmpi ne, %1, %c0_i32_0 : i32
    scf.if %2 {
      %cst_35 = arith.constant 0xFF800000 : f32
      %63 = vector.broadcast %cst_35 : f32 to vector<1x1xf32>
      %c0_36 = arith.constant 0 : index
      %c0_37 = arith.constant 0 : index
      %64 = vector.load %arg11[%c0_36, %c0_37] : memref<1x1xf32, #tpu.memory_space<vmem>>, vector<1x1xf32>
      tpu.vector_store %arg11[%c0_36, %c0_37], %63 {strides = array<i32>} : memref<1x1xf32, #tpu.memory_space<vmem>>, vector<1x1xf32>,
      %cst_38 = arith.constant 0.000000e+00 : f32
      %65 = vector.broadcast %cst_38 : f32 to vector<1x1xf32>
      %c0_39 = arith.constant 0 : index
      %c0_40 = arith.constant 0 : index
      %66 = vector.load %arg12[%c0_39, %c0_40] : memref<1x1xf32, #tpu.memory_space<vmem>>, vector<1x1xf32>
      tpu.vector_store %arg12[%c0_39, %c0_40], %65 {strides = array<i32>} : memref<1x1xf32, #tpu.memory_space<vmem>>, vector<1x1xf32>,
      %cst_41 = arith.constant 0.000000e+00 : f32
      %67 = vector.broadcast %cst_41 : f32 to vector<1x128xf32>
      %c0_42 = arith.constant 0 : index
      %c0_43 = arith.constant 0 : index
      %68 = vector.load %arg13[%c0_42, %c0_43] : memref<1x128xf32, #tpu.memory_space<vmem>>, vector<1x128xf32>
      tpu.vector_store %arg13[%c0_42, %c0_43], %67 {strides = array<i32>} : memref<1x128xf32, #tpu.memory_space<vmem>>, vector<1x128xf32>,
    } else {
    }
    %c0 = arith.constant 0 : index
    %c0_1 = arith.constant 0 : index
    %3 = vector.load %arg1[%c0, %c0_1] : memref<128x256xbf16, #tpu.memory_space<vmem>>, vector<128x256xbf16>
    %c0_2 = arith.constant 0 : index
    %c0_3 = arith.constant 0 : index
    %4 = vector.load %arg2[%c0_2, %c0_3] : memref<256x128xbf16, #tpu.memory_space<vmem>>, vector<256x128xbf16>
    %cst = arith.constant dense<0.000000e+00> : vector<128x128xf32>
    %5 = tpu.matmul %3, %4, %cst {dimension_numbers = #tpu.dot_dimension_numbers<[1], [0], [0], [1], [0, 0, 1, 1], [], []>} : vector<128x256xbf16>, vector<256x128xbf16>, vector<128x128xf32> -> vector<128x128xf32>
    %cst_4 = arith.constant 0.000000e+00 : f32
    %6 = vector.broadcast %cst_4 : f32 to vector<128x128xf32>
    %7 = arith.maximumf %5, %6 : vector<128x128xf32>
    %8 = arith.truncf %7 : vector<128x128xf32> to vector<128x128xbf16>
    %c0_5 = arith.constant 0 : index
    %c0_6 = arith.constant 0 : index
    %9 = vector.load %arg3[%c0_5, %c0_6] : memref<128x256xbf16, #tpu.memory_space<vmem>>, vector<128x256xbf16>
    %cst_7 = arith.constant dense<0.000000e+00> : vector<128x256xf32>
    %10 = tpu.matmul %8, %9, %cst_7 {dimension_numbers = #tpu.dot_dimension_numbers<[1], [0], [0], [1], [0, 0, 1, 1], [], []>} : vector<128x128xbf16>, vector<128x256xbf16>, vector<128x256xf32> -> vector<128x256xf32>
    %c0_8 = arith.constant 0 : index
    %c0_9 = arith.constant 0 : index
    %11 = vector.load %arg4[%c0_8, %c0_9] : memref<1x256xf32, #tpu.memory_space<vmem>>, vector<1x256xf32>
    %12 = vector.broadcast %11 : vector<1x256xf32> to vector<128x256xf32>
    %13 = arith.addf %10, %12 : vector<128x256xf32>
    %14 = vector.extract_strided_slice %13 {offsets = [0, 0], sizes = [128, 128], strides = [1, 1]} : vector<128x256xf32> to vector<128x128xf32>
    %15 = math.tanh %14 : vector<128x128xf32>
    %16 = vector.extract_strided_slice %13 {offsets = [0, 128], sizes = [128, 128], strides = [1, 1]} : vector<128x256xf32> to vector<128x128xf32>
    %17 = arith.negf %16 : vector<128x128xf32>
    %18 = math.exp %17 : vector<128x128xf32>
    %cst_10 = arith.constant 1.000000e+00 : f32
    %19 = vector.broadcast %cst_10 : f32 to vector<128x128xf32>
    %20 = arith.addf %19, %18 : vector<128x128xf32>
    %21 = arith.divf %19, %20 : vector<128x128xf32>
    %22 = arith.mulf %15, %21 : vector<128x128xf32>
    %c0_11 = arith.constant 0 : index
    %c0_12 = arith.constant 0 : index
    %23 = vector.load %arg5[%c0_11, %c0_12] : memref<1x128xf32, #tpu.memory_space<vmem>>, vector<1x128xf32>
    %cst_13 = arith.constant dense<0.000000e+00> : vector<1x128xf32>
    %24 = tpu.matmul %23, %22, %cst_13 {dimension_numbers = #tpu.dot_dimension_numbers<[1], [1], [0], [0], [0, 0, 1, 0], [], []>} : vector<1x128xf32>, vector<128x128xf32>, vector<1x128xf32> -> vector<1x128xf32>
    %c0_14 = arith.constant 0 : index
    %c0_15 = arith.constant 0 : index
    %25 = vector.load %arg6[%c0_14, %c0_15] : memref<1x1xf32, #tpu.memory_space<vmem>>, vector<1x1xf32>
    %26 = vector.broadcast %25 : vector<1x1xf32> to vector<1x128xf32>
    %27 = arith.addf %24, %26 : vector<1x128xf32>
    %c0_16 = arith.constant 0 : index
    %c0_17 = arith.constant 0 : index
    %28 = vector.load %arg10[%c0_16, %c0_17] : memref<1x128xf32, #tpu.memory_space<vmem>>, vector<1x128xf32>
    tpu.vector_store %arg10[%c0_16, %c0_17], %27 {strides = array<i32>} : memref<1x128xf32, #tpu.memory_space<vmem>>, vector<1x128xf32>,
    %c128_i32 = arith.constant 128 : i32
    %29 = arith.muli %arg0, %c128_i32 : i32
    %30 = tpu.iota {dimensions = array<i32: 1>} : vector<1x128xi32>
    %31 = vector.broadcast %29 : i32 to vector<1x128xi32>
    %32 = arith.addi %31, %30 : vector<1x128xi32>
    %c300_i32 = arith.constant 300 : i32
    %33 = vector.broadcast %c300_i32 : i32 to vector<1x128xi32>
    %34 = arith.cmpi slt, %32, %33 : vector<1x128xi32>
    %cst_18 = arith.constant 0xFF800000 : f32
    %35 = vector.broadcast %cst_18 : f32 to vector<1x128xf32>
    %36 = arith.select %34, %27, %35 : vector<1x128xi1>, vector<1x128xf32>
    %c0_19 = arith.constant 0 : index
    %c0_20 = arith.constant 0 : index
    %37 = vector.load %arg11[%c0_19, %c0_20] : memref<1x1xf32, #tpu.memory_space<vmem>>, vector<1x1xf32>
    %cst_21 = arith.constant dense<0xFF800000> : vector<1xf32>
    %38 = vector.multi_reduction <maximumf>, %36, %cst_21 [1] : vector<1x128xf32> to vector<1xf32>
    %39 = vector.shape_cast %38 : vector<1xf32> to vector<1x1xf32>
    %40 = arith.maximumf %37, %39 : vector<1x1xf32>
    %41 = arith.subf %37, %40 : vector<1x1xf32>
    %42 = math.exp %41 : vector<1x1xf32>
    %43 = vector.broadcast %40 : vector<1x1xf32> to vector<1x128xf32>
    %44 = arith.subf %36, %43 : vector<1x128xf32>
    %45 = math.exp %44 : vector<1x128xf32>
    %c0_22 = arith.constant 0 : index
    %c0_23 = arith.constant 0 : index
    %46 = vector.load %arg12[%c0_22, %c0_23] : memref<1x1xf32, #tpu.memory_space<vmem>>, vector<1x1xf32>
    %47 = arith.mulf %42, %46 : vector<1x1xf32>
    %cst_24 = arith.constant dense<0.000000e+00> : vector<1xf32>
    %48 = vector.multi_reduction <add>, %45, %cst_24 [1] : vector<1x128xf32> to vector<1xf32>
    %49 = vector.shape_cast %48 : vector<1xf32> to vector<1x1xf32>
    %50 = arith.addf %47, %49 : vector<1x1xf32>
    %c0_25 = arith.constant 0 : index
    %c0_26 = arith.constant 0 : index
    %51 = vector.load %arg12[%c0_25, %c0_26] : memref<1x1xf32, #tpu.memory_space<vmem>>, vector<1x1xf32>
    tpu.vector_store %arg12[%c0_25, %c0_26], %50 {strides = array<i32>} : memref<1x1xf32, #tpu.memory_space<vmem>>, vector<1x1xf32>,
    %c0_27 = arith.constant 0 : index
    %c0_28 = arith.constant 0 : index
    %52 = vector.load %arg13[%c0_27, %c0_28] : memref<1x128xf32, #tpu.memory_space<vmem>>, vector<1x128xf32>
    %53 = vector.broadcast %42 : vector<1x1xf32> to vector<1x128xf32>
    %54 = arith.mulf %53, %52 : vector<1x128xf32>
    %55 = arith.truncf %45 : vector<1x128xf32> to vector<1x128xbf16>
    %cst_29 = arith.constant dense<0.000000e+00> : vector<1x128xf32>
    %56 = tpu.matmul %55, %8, %cst_29 {dimension_numbers = #tpu.dot_dimension_numbers<[1], [0], [0], [1], [0, 0, 1, 1], [], []>} : vector<1x128xbf16>, vector<128x128xbf16>, vector<1x128xf32> -> vector<1x128xf32>
    %57 = arith.addf %54, %56 : vector<1x128xf32>
    %c0_30 = arith.constant 0 : index
    %c0_31 = arith.constant 0 : index
    %58 = vector.load %arg13[%c0_30, %c0_31] : memref<1x128xf32, #tpu.memory_space<vmem>>, vector<1x128xf32>
    tpu.vector_store %arg13[%c0_30, %c0_31], %57 {strides = array<i32>} : memref<1x128xf32, #tpu.memory_space<vmem>>, vector<1x128xf32>,
    %c0_32 = arith.constant 0 : index
    %c0_33 = arith.constant 0 : index
    %59 = vector.load %arg11[%c0_32, %c0_33] : memref<1x1xf32, #tpu.memory_space<vmem>>, vector<1x1xf32>
    tpu.vector_store %arg11[%c0_32, %c0_33], %40 {strides = array<i32>} : memref<1x1xf32, #tpu.memory_space<vmem>>, vector<1x1xf32>,
    %c2_i32 = arith.constant 2 : i32
    %60 = arith.cmpi eq, %arg0, %c2_i32 : i32
    %61 = arith.extui %60 : i1 to i32
    %c0_i32_34 = arith.constant 0 : i32
    %62 = arith.cmpi ne, %61, %c0_i32_34 : i32
    scf.if %62 {
      %c0_35 = arith.constant 0 : index
      %c0_36 = arith.constant 0 : index
      %63 = vector.load %arg13[%c0_35, %c0_36] : memref<1x128xf32, #tpu.memory_space<vmem>>, vector<1x128xf32>
      %c0_37 = arith.constant 0 : index
      %c0_38 = arith.constant 0 : index
      %64 = vector.load %arg12[%c0_37, %c0_38] : memref<1x1xf32, #tpu.memory_space<vmem>>, vector<1x1xf32>
      %65 = vector.broadcast %64 : vector<1x1xf32> to vector<1x128xf32>
      %66 = arith.divf %63, %65 : vector<1x128xf32>
      %c0_39 = arith.constant 0 : index
      %c0_40 = arith.constant 0 : index
      %67 = vector.load %arg7[%c0_39, %c0_40] : memref<128x4xf32, #tpu.memory_space<vmem>>, vector<128x4xf32>
      %cst_41 = arith.constant dense<0.000000e+00> : vector<1x4xf32>
      %68 = tpu.matmul %66, %67, %cst_41 {dimension_numbers = #tpu.dot_dimension_numbers<[1], [0], [0], [1], [0, 0, 1, 1], [], []>} : vector<1x128xf32>, vector<128x4xf32>, vector<1x4xf32> -> vector<1x4xf32>
      %c0_42 = arith.constant 0 : index
      %c0_43 = arith.constant 0 : index
      %69 = vector.load %arg8[%c0_42, %c0_43] : memref<1x4xf32, #tpu.memory_space<vmem>>, vector<1x4xf32>
      %70 = arith.addf %68, %69 : vector<1x4xf32>
      %c0_44 = arith.constant 0 : index
      %c0_45 = arith.constant 0 : index
      %71 = vector.load %arg9[%c0_44, %c0_45] : memref<1x4xf32, #tpu.memory_space<vmem>>, vector<1x4xf32>
      tpu.vector_store %arg9[%c0_44, %c0_45], %70 {strides = array<i32>} : memref<1x4xf32, #tpu.memory_space<vmem>>, vector<1x4xf32>,
    } else {
    }
    return
  }
  func.func @transform_0(%arg0: i32) -> (i32, i32) {
    %c0_i32 = arith.constant 0 : i32
    %c0_i32_0 = arith.constant 0 : i32
    return %arg0, %c0_i32 : i32, i32
  }
  func.func @transform_1(%arg0: i32) -> (i32, i32) {
    %c0_i32 = arith.constant 0 : i32
    %c0_i32_0 = arith.constant 0 : i32
    %c0_i32_1 = arith.constant 0 : i32
    return %c0_i32, %c0_i32_0 : i32, i32
  }
  func.func @transform_2(%arg0: i32) -> (i32, i32) {
    %c0_i32 = arith.constant 0 : i32
    %c0_i32_0 = arith.constant 0 : i32
    %c0_i32_1 = arith.constant 0 : i32
    return %c0_i32, %c0_i32_0 : i32, i32
  }
  func.func @transform_3(%arg0: i32) -> (i32, i32) {
    %c0_i32 = arith.constant 0 : i32
    %c0_i32_0 = arith.constant 0 : i32
    %c0_i32_1 = arith.constant 0 : i32
    return %c0_i32, %c0_i32_0 : i32, i32
  }
  func.func @transform_4(%arg0: i32) -> (i32, i32) {
    %c0_i32 = arith.constant 0 : i32
    %c0_i32_0 = arith.constant 0 : i32
    %c0_i32_1 = arith.constant 0 : i32
    return %c0_i32, %c0_i32_0 : i32, i32
  }
  func.func @transform_5(%arg0: i32) -> (i32, i32) {
    %c0_i32 = arith.constant 0 : i32
    %c0_i32_0 = arith.constant 0 : i32
    %c0_i32_1 = arith.constant 0 : i32
    return %c0_i32, %c0_i32_0 : i32, i32
  }
  func.func @transform_6(%arg0: i32) -> (i32, i32) {
    %c0_i32 = arith.constant 0 : i32
    %c0_i32_0 = arith.constant 0 : i32
    %c0_i32_1 = arith.constant 0 : i32
    return %c0_i32, %c0_i32_0 : i32, i32
  }
  func.func @transform_7(%arg0: i32) -> (i32, i32) {
    %c0_i32 = arith.constant 0 : i32
    %c0_i32_0 = arith.constant 0 : i32
    %c0_i32_1 = arith.constant 0 : i32
    return %c0_i32, %c0_i32_0 : i32, i32
  }
  func.func @transform_8(%arg0: i32) -> (i32, i32) {
    %c0_i32 = arith.constant 0 : i32
    %c0_i32_0 = arith.constant 0 : i32
    %c0_i32_1 = arith.constant 0 : i32
    return %c0_i32, %c0_i32_0 : i32, i32
  }
  func.func @transform_9(%arg0: i32) -> (i32, i32) {
    %c0_i32 = arith.constant 0 : i32
    %c0_i32_0 = arith.constant 0 : i32
    return %c0_i32, %arg0 : i32, i32
  }
}

</mosaic_0001>

<llo_original>
// kernel: tpu_custom_call.1
$region0: #{tpu_custom_call.1}
  #allocation0 [shape = 'u32[]', space=smem, size = 0x4, offset = 0x4, fixed_abs, tag = 'smem constant byte address 0x4 - core index']
  #allocation1 [shape = 'u32[144,128]{1,0:T(1,128)}', space=vmem, size = 0x12000, scoped, tag = 'internal scratch']
  #allocation2 [shape = 'f32[1,1]{1,0:T(1,128)}', space=vmem, size = 0x200, scoped, tag = 'scratch operand']
  #allocation3 [shape = 'f32[1,1]{1,0:T(1,128)}', space=vmem, size = 0x200, scoped, tag = 'scratch operand']
  #allocation4 [shape = 'f32[1,128]{1,0:T(1,128)}', space=vmem, size = 0x200, scoped, tag = 'scratch operand']
  #allocation5 [shape = 'f32[1,1]{1,0:T(1,128)S(1)}', space=vmem, size = 0x200, scoped, tag = 'scoped memory for tpu_custom_call.1']
  %s0 = inlined_call_operand.hbm [shape: bf16[384,256], index: 0, kind: input, shape index: {}]
  %s1 = inlined_call_operand.vmem [shape: bf16[256,128], index: 1, kind: input, shape index: {}]
  %s2 = inlined_call_operand.hbm [shape: bf16[128,256], index: 2, kind: input, shape index: {}]
  %s3 = inlined_call_operand.vmem [shape: f32[1,256], index: 3, kind: input, shape index: {}]
  %s4 = inlined_call_operand.vmem [shape: f32[1,128], index: 4, kind: input, shape index: {}]
  %s5 = inlined_call_operand.<no memory space> [shape: f32[1,1], index: 5, kind: input, shape index: {}]
  %s6 = inlined_call_operand.vmem [shape: f32[128,4], index: 6, kind: input, shape index: {}]
  %s7 = inlined_call_operand.vmem [shape: f32[1,4], index: 7, kind: input, shape index: {}]
  %s8 = inlined_call_operand.hbm [shape: f32[1,4], index: 8, kind: output, shape index: {0}]
  %s9 = inlined_call_operand.hbm [shape: f32[1,384], index: 9, kind: output, shape index: {1}]
  %10 = xla_tuple %s8, %s9
  %s11 = sld [smem:[#allocation0]]
  $region89: #{tpu_custom_call.1} parent=0
    _
  %s13 = ssub.s32 1, %s11
  %s14 = scalar_select 0, %s13, %s11
  %v15 = vstv %s5
  %16 = vst [vmem:[#allocation5] sm:$0x1] %v15
  $region1: #{tpu_custom_call.1} parent=0
    #allocation6 [shape = 'u8[131072]{0}', space=vmem, size = 0x20000, scoped, tag = 'input window, operand 0']
    #allocation7 [shape = 's32[2]{0}', space=sflag, size = 0x8, scoped, tag = 'scoped memory for tpu_custom_call.1']
    #allocation8 [shape = 's32[2]{0}', space=sflag, size = 0x8, scoped, tag = 'scoped memory for tpu_custom_call.1']
    #allocation9 [shape = 'u8[65536]{0}', space=vmem, size = 0x10000, scoped, tag = 'input window, operand 2, single buffered']
    #allocation10 [shape = 's32[1]{0}', space=sflag, size = 0x4, scoped, tag = 'scoped memory for tpu_custom_call.1']
    #allocation11 [shape = 'u8[512]{0}', space=vmem, size = 0x400, scoped, tag = 'output window, operand 0, single buffered']
    #allocation12 [shape = 'u8[1024]{0}', space=vmem, size = 0x400, scoped, tag = 'output window, operand 1']
    #allocation13 [shape = 's32[2]{0}', space=sflag, size = 0x8, scoped, tag = 'scoped memory for tpu_custom_call.1']
    %17 = vsyncpa [#allocation7], 0
    %s18 = scalar_lea.sflag [#allocation7], 1
    %19 = vsyncpa %s18, 0
    %20 = vsyncpa [#allocation10], 0
    %21 = vsyncpa [#allocation8], 0
    %22 = vsyncpa [#allocation13], 0
    %s23 = scalar_lea.sflag [#allocation13], 1
    %24 = vsyncpa %s23, 0
    loop: start=0, step=1, limit=5
    $region2: #{tpu_custom_call.1} parent=1 // loop_pre_header
      _
    $region3: #{tpu_custom_call.1} parent=1 // loop_header
      %s26 = sphi 0, %s30
      %p27 = scmp.ge.s32.totalorder %s26, 5
      %s36 = sphi 0, %s38
      %s39 = sphi 0, %s36
      %s40 = sphi 0, %s39
      %s56 = sphi 0, %s40
      %s60 = sphi 0, %s60
      %s62 = sphi 0, %s60
      %s63 = sphi 0, %s62
      %s77 = sphi 0, %s63
      %s81 = sphi 0, %s81
      %s83 = sphi 0, %s81
      %s84 = sphi 0, %s83
      %s98 = sphi 0, %s84
      %s102 = sphi 0, %s102
      %s104 = sphi 0, %s102
      %s105 = sphi 0, %s104
      %s119 = sphi 0, %s105
      %s123 = sphi 0, %s123
      %s125 = sphi 0, %s123
      %s126 = sphi 0, %s125
      %s140 = sphi 0, %s126
      %s144 = sphi 0, %s144
      %s146 = sphi 0, %s144
      %s147 = sphi 0, %s146
      %s161 = sphi 0, %s147
      %s165 = sphi 0, %s165
      %s167 = sphi 0, %s165
      %s168 = sphi 0, %s167
      %s182 = sphi 0, %s168
      %s186 = sphi 0, %s186
      %s188 = sphi 0, %s186
      %s189 = sphi 0, %s188
      %s203 = sphi 0, %s189
      %s207 = sphi 0, %s207
      %s209 = sphi 0, %s207
      %s210 = sphi 0, %s209
      %s224 = sphi 0, %s210
      %s230 = sphi 0, %s232
      %s233 = sphi 0, %s230
      %s234 = sphi 0, %s233
      %s250 = sphi 0, %s234
    $region4: #{tpu_custom_call.1} parent=1 // loop_header_branch
      %29 = sbr.rel (%p27) target = $region8
    $region5: #{tpu_custom_call.1} parent=1 // loop_body
      %s31 = ssub.s32 %s26, 1
      %s32 = ssub.s32 %s26, 2
      %s33 = sadd.s32 %s26, 1
      %s34 = ssub.s32 %s26, %s33
      %p35 = scmp.eq.s32.totalorder %s34, 0
      %s37 = sadd.s32 %s36, 1
      %s38 = scalar_select %p35, %s36, %s37
      %p41 = pneg %p35
      %p42 = scmp.eq.s32.totalorder %s26, 2
      %p43 = por %p41, %p42
      %p44 = scmp.ne.s32.totalorder %s36, %s39
      %p45 = scmp.eq.s32.totalorder %s26, 0
      %p46 = por %p44, %p45
      %p47 = scmp.ne.s32.totalorder %s36, %s39
      %p48 = scmp.eq.s32.totalorder %s31, 2
      %p49 = por %p47, %p48
      %p50 = scmp.ne.s32.totalorder %s39, %s40
      %p51 = scmp.eq.s32.totalorder %s31, 0
      %p52 = por %p50, %p51
      %p53 = scmp.ne.s32.totalorder %s39, %s40
      %p54 = scmp.eq.s32.totalorder %s32, 2
      %p55 = por %p53, %p54
      %p57 = scmp.ne.s32.totalorder %s40, %s56
      %p58 = scmp.eq.s32.totalorder %s32, 0
      %p59 = por %p57, %p58
      %s61 = sadd.s32 %s60, 1
      %p64 = scmp.eq.s32.totalorder %s26, 2
      %p65 = scmp.ne.s32.totalorder %s60, %s62
      %p66 = scmp.eq.s32.totalorder %s26, 0
      %p67 = por %p65, %p66
      %p68 = scmp.ne.s32.totalorder %s60, %s62
      %p69 = scmp.eq.s32.totalorder %s31, 2
      %p70 = por %p68, %p69
      %p71 = scmp.ne.s32.totalorder %s62, %s63
      %p72 = scmp.eq.s32.totalorder %s31, 0
      %p73 = por %p71, %p72
      %p74 = scmp.ne.s32.totalorder %s62, %s63
      %p75 = scmp.eq.s32.totalorder %s32, 2
      %p76 = por %p74, %p75
      %p78 = scmp.ne.s32.totalorder %s63, %s77
      %p79 = scmp.eq.s32.totalorder %s32, 0
      %p80 = por %p78, %p79
      %s82 = sadd.s32 %s81, 1
      %p85 = scmp.eq.s32.totalorder %s26, 2
      %p86 = scmp.ne.s32.totalorder %s81, %s83
      %p87 = scmp.eq.s32.totalorder %s26, 0
      %p88 = por %p86, %p87
      %p89 = scmp.ne.s32.totalorder %s81, %s83
      %p90 = scmp.eq.s32.totalorder %s31, 2
      %p91 = por %p89, %p90
      %p92 = scmp.ne.s32.totalorder %s83, %s84
      %p93 = scmp.eq.s32.totalorder %s31, 0
      %p94 = por %p92, %p93
      %p95 = scmp.ne.s32.totalorder %s83, %s84
      %p96 = scmp.eq.s32.totalorder %s32, 2
      %p97 = por %p95, %p96
      %p99 = scmp.ne.s32.totalorder %s84, %s98
      %p100 = scmp.eq.s32.totalorder %s32, 0
      %p101 = por %p99, %p100
      %s103 = sadd.s32 %s102, 1
      %p106 = scmp.eq.s32.totalorder %s26, 2
      %p107 = scmp.ne.s32.totalorder %s102, %s104
      %p108 = scmp.eq.s32.totalorder %s26, 0
      %p109 = por %p107, %p108
      %p110 = scmp.ne.s32.totalorder %s102, %s104
      %p111 = scmp.eq.s32.totalorder %s31, 2
      %p112 = por %p110, %p111
      %p113 = scmp.ne.s32.totalorder %s104, %s105
      %p114 = scmp.eq.s32.totalorder %s31, 0
      %p115 = por %p113, %p114
      %p116 = scmp.ne.s32.totalorder %s104, %s105
      %p117 = scmp.eq.s32.totalorder %s32, 2
      %p118 = por %p116, %p117
      %p120 = scmp.ne.s32.totalorder %s105, %s119
      %p121 = scmp.eq.s32.totalorder %s32, 0
      %p122 = por %p120, %p121
      %s124 = sadd.s32 %s123, 1
      %p127 = scmp.eq.s32.totalorder %s26, 2
      %p128 = scmp.ne.s32.totalorder %s123, %s125
      %p129 = scmp.eq.s32.totalorder %s26, 0
      %p130 = por %p128, %p129
      %p131 = scmp.ne.s32.totalorder %s123, %s125
      %p132 = scmp.eq.s32.totalorder %s31, 2
      %p133 = por %p131, %p132
      %p134 = scmp.ne.s32.totalorder %s125, %s126
      %p135 = scmp.eq.s32.totalorder %s31, 0
      %p136 = por %p134, %p135
      %p137 = scmp.ne.s32.totalorder %s125, %s126
      %p138 = scmp.eq.s32.totalorder %s32, 2
      %p139 = por %p137, %p138
      %p141 = scmp.ne.s32.totalorder %s126, %s140
      %p142 = scmp.eq.s32.totalorder %s32, 0
      %p143 = por %p141, %p142
      %s145 = sadd.s32 %s144, 1
      %p148 = scmp.eq.s32.totalorder %s26, 2
      %p149 = scmp.ne.s32.totalorder %s144, %s146
      %p150 = scmp.eq.s32.totalorder %s26, 0
      %p151 = por %p149, %p150
      %p152 = scmp.ne.s32.totalorder %s144, %s146
      %p153 = scmp.eq.s32.totalorder %s31, 2
      %p154 = por %p152, %p153
      %p155 = scmp.ne.s32.totalorder %s146, %s147
      %p156 = scmp.eq.s32.totalorder %s31, 0
      %p157 = por %p155, %p156
      %p158 = scmp.ne.s32.totalorder %s146, %s147
      %p159 = scmp.eq.s32.totalorder %s32, 2
      %p160 = por %p158, %p159
      %p162 = scmp.ne.s32.totalorder %s147, %s161
      %p163 = scmp.eq.s32.totalorder %s32, 0
      %p164 = por %p162, %p163
      %s166 = sadd.s32 %s165, 1
      %p169 = scmp.eq.s32.totalorder %s26, 2
      %p170 = scmp.ne.s32.totalorder %s165, %s167
      %p171 = scmp.eq.s32.totalorder %s26, 0
      %p172 = por %p170, %p171
      %p173 = scmp.ne.s32.totalorder %s165, %s167
      %p174 = scmp.eq.s32.totalorder %s31, 2
      %p175 = por %p173, %p174
      %p176 = scmp.ne.s32.totalorder %s167, %s168
      %p177 = scmp.eq.s32.totalorder %s31, 0
      %p178 = por %p176, %p177
      %p179 = scmp.ne.s32.totalorder %s167, %s168
      %p180 = scmp.eq.s32.totalorder %s32, 2
      %p181 = por %p179, %p180
      %p183 = scmp.ne.s32.totalorder %s168, %s182
      %p184 = scmp.eq.s32.totalorder %s32, 0
      %p185 = por %p183, %p184
      %s187 = sadd.s32 %s186, 1
      %p190 = scmp.eq.s32.totalorder %s26, 2
      %p191 = scmp.ne.s32.totalorder %s186, %s188
      %p192 = scmp.eq.s32.totalorder %s26, 0
      %p193 = por %p191, %p192
      %p194 = scmp.ne.s32.totalorder %s186, %s188
      %p195 = scmp.eq.s32.totalorder %s31, 2
      %p196 = por %p194, %p195
      %p197 = scmp.ne.s32.totalorder %s188, %s189
      %p198 = scmp.eq.s32.totalorder %s31, 0
      %p199 = por %p197, %p198
      %p200 = scmp.ne.s32.totalorder %s188, %s189
      %p201 = scmp.eq.s32.totalorder %s32, 2
      %p202 = por %p200, %p201
      %p204 = scmp.ne.s32.totalorder %s189, %s203
      %p205 = scmp.eq.s32.totalorder %s32, 0
      %p206 = por %p204, %p205
      %s208 = sadd.s32 %s207, 1
      %p211 = scmp.eq.s32.totalorder %s26, 2
      %p212 = scmp.ne.s32.totalorder %s207, %s209
      %p213 = scmp.eq.s32.totalorder %s26, 0
      %p214 = por %p212, %p213
      %p215 = scmp.ne.s32.totalorder %s207, %s209
      %p216 = scmp.eq.s32.totalorder %s31, 2
      %p217 = por %p215, %p216
      %p218 = scmp.ne.s32.totalorder %s209, %s210
      %p219 = scmp.eq.s32.totalorder %s31, 0
      %p220 = por %p218, %p219
      %p221 = scmp.ne.s32.totalorder %s209, %s210
      %p222 = scmp.eq.s32.totalorder %s32, 2
      %p223 = por %p221, %p222
      %p225 = scmp.ne.s32.totalorder %s210, %s224
      %p226 = scmp.eq.s32.totalorder %s32, 0
      %p227 = por %p225, %p226
      %s228 = ssub.s32 %s26, %s33
      %p229 = scmp.eq.s32.totalorder %s228, 0
      %s231 = sadd.s32 %s230, 1
      %s232 = scalar_select %p229, %s230, %s231
      %p235 = pneg %p229
      %p236 = scmp.eq.s32.totalorder %s26, 2
      %p237 = por %p235, %p236
      %p238 = scmp.ne.s32.totalorder %s230, %s233
      %p239 = scmp.eq.s32.totalorder %s26, 0
      %p240 = por %p238, %p239
      %p241 = scmp.ne.s32.totalorder %s230, %s233
      %p242 = scmp.eq.s32.totalorder %s31, 2
      %p243 = por %p241, %p242
      %p244 = scmp.ne.s32.totalorder %s233, %s234
      %p245 = scmp.eq.s32.totalorder %s31, 0
      %p246 = por %p244, %p245
      %p247 = scmp.ne.s32.totalorder %s233, %s234
      %p248 = scmp.eq.s32.totalorder %s32, 2
      %p249 = por %p247, %p248
      %p251 = scmp.ne.s32.totalorder %s234, %s250
      %p252 = scmp.eq.s32.totalorder %s32, 0
      %p253 = por %p251, %p252
      %p254 = scmp.le.s32.totalorder 1, %s26
      %p255 = scmp.lt.s32.totalorder %s26, 4
      %p256 = pnand %p254, %p255
      %p257 = pneg %p256
      // Predicated region
      $region9: #{tpu_custom_call.1} parent=5 // pred_check
        _
      $region10: #{tpu_custom_call.1} parent=5 // pred_check_branch
        %259 = sbr.rel (%p256) target = $region12
      $region11: #{tpu_custom_call.1} parent=5 // pred_region
        %s260 = ssub.s32 %s26, 1
        // Predicated region
        $region13: #{tpu_custom_call.1} parent=11 // pred_check
          %p261 = pneg %p73
        $region14: #{tpu_custom_call.1} parent=11 // pred_check_branch
          %263 = sbr.rel (%p261) target = $region16
        $region15: #{tpu_custom_call.1} parent=11 // pred_region
          _
        $region16: #{tpu_custom_call.1} parent=11 // pred_fallthru
          _
        // Predicated region
        $region17: #{tpu_custom_call.1} parent=11 // pred_check
          %p264 = pneg %p94
        $region18: #{tpu_custom_call.1} parent=11 // pred_check_branch
          %266 = sbr.rel (%p264) target = $region20
        $region19: #{tpu_custom_call.1} parent=11 // pred_region
          %s268 = ssub.s32 2048, 2048
          %269 = vsyncadd [#allocation10], %s268
          %s270 = sshll.u32 [#allocation9], 4
          %s271 = int_to_ptr.vmem [resolvable:$true] %s270
          %276 = dma.hbm_to_vmem [thread:$0]  %s2, 2048, %s271, [#allocation10], 128, 128, 8
        $region20: #{tpu_custom_call.1} parent=11 // pred_fallthru
          _
        // Predicated region
        $region21: #{tpu_custom_call.1} parent=11 // pred_check
          %p277 = pneg %p115
        $region22: #{tpu_custom_call.1} parent=11 // pred_check_branch
          %279 = sbr.rel (%p277) target = $region24
        $region23: #{tpu_custom_call.1} parent=11 // pred_region
          _
        $region24: #{tpu_custom_call.1} parent=11 // pred_fallthru
          _
        // Predicated region
        $region25: #{tpu_custom_call.1} parent=11 // pred_check
          %p280 = pneg %p136
        $region26: #{tpu_custom_call.1} parent=11 // pred_check_branch
          %282 = sbr.rel (%p280) target = $region28
        $region27: #{tpu_custom_call.1} parent=11 // pred_region
          _
        $region28: #{tpu_custom_call.1} parent=11 // pred_fallthru
          _
        // Predicated region
        $region29: #{tpu_custom_call.1} parent=11 // pred_check
          %p283 = pneg %p157
        $region30: #{tpu_custom_call.1} parent=11 // pred_check_branch
          %285 = sbr.rel (%p283) target = $region32
        $region31: #{tpu_custom_call.1} parent=11 // pred_region
          _
        $region32: #{tpu_custom_call.1} parent=11 // pred_fallthru
          _
        // Predicated region
        $region33: #{tpu_custom_call.1} parent=11 // pred_check
          %p286 = pneg %p178
        $region34: #{tpu_custom_call.1} parent=11 // pred_check_branch
          %288 = sbr.rel (%p286) target = $region36
        $region35: #{tpu_custom_call.1} parent=11 // pred_region
          _
        $region36: #{tpu_custom_call.1} parent=11 // pred_fallthru
          _
        // Predicated region
        $region37: #{tpu_custom_call.1} parent=11 // pred_check
          %p289 = pneg %p199
        $region38: #{tpu_custom_call.1} parent=11 // pred_check_branch
          %291 = sbr.rel (%p289) target = $region40
        $region39: #{tpu_custom_call.1} parent=11 // pred_region
          _
        $region40: #{tpu_custom_call.1} parent=11 // pred_fallthru
          _
      $region12: #{tpu_custom_call.1} parent=5 // pred_fallthru
        _
      %p292 = scmp.lt.s32.totalorder %s26, 3
      // Predicated region
      $region41: #{tpu_custom_call.1} parent=5 // pred_check
        %p293 = pneg %p292
      $region42: #{tpu_custom_call.1} parent=5 // pred_check_branch
        %295 = sbr.rel (%p293) target = $region44
      $region43: #{tpu_custom_call.1} parent=5 // pred_region
        // Predicated region
        $region45: #{tpu_custom_call.1} parent=43 // pred_check
          %p296 = pneg %p46
        $region46: #{tpu_custom_call.1} parent=43 // pred_check_branch
          %298 = sbr.rel (%p296) target = $region48
        $region47: #{tpu_custom_call.1} parent=43 // pred_region
          %s299 = sand.u32 %s36, 1
          %s300 = scalar_lea.sflag [#allocation7], %s299
          %s301 = sand.u32 %s36, 1
          %s302 = smul.addr %s301, 128
          %s303 = scalar_lea.vmem [#allocation6], %s302
          %s304 = smul.u32 16, %s26
          %s306 = ssub.s32 2048, 2048
          %307 = vsyncadd %s300, %s306
          %s308 = smul.addr %s304, 2
          %s309 = smul.addr %s308, 64
          %s310 = scalar_lea.hbm %s0, %s309
          %s311 = sshll.u32 %s303, 4
          %s312 = int_to_ptr.vmem [resolvable:$true] %s311
          %317 = dma.hbm_to_vmem [thread:$0]  %s310, 2048, %s312, %s300, 128, 128, 8
        $region48: #{tpu_custom_call.1} parent=43 // pred_fallthru
          _
      $region44: #{tpu_custom_call.1} parent=5 // pred_fallthru
        _
      %p318 = scmp.le.s32.totalorder 1, %s26
      %p319 = scmp.lt.s32.totalorder %s26, 4
      %p320 = pnand %p318, %p319
      %p321 = pneg %p320
      // Predicated region
      $region49: #{tpu_custom_call.1} parent=5 // pred_check
        _
      $region50: #{tpu_custom_call.1} parent=5 // pred_check_branch
        %323 = sbr.rel (%p320) target = $region52
      $region51: #{tpu_custom_call.1} parent=5 // pred_region
        %s324 = ssub.s32 %s26, 1
        %s325 = sand.u32 %s39, 1
        %s326 = scalar_lea.sflag [#allocation7], %s325
        %s327 = sand.u32 %s39, 1
        %s328 = smul.addr %s327, 128
        %s329 = scalar_lea.vmem [#allocation6], %s328
        // Predicated region
        $region53: #{tpu_custom_call.1} parent=51 // pred_check
          %p330 = pneg %p52
        $region54: #{tpu_custom_call.1} parent=51 // pred_check_branch
          %332 = sbr.rel (%p330) target = $region56
        $region55: #{tpu_custom_call.1} parent=51 // pred_region
          %333 = dma.done %s326, 2048
        $region56: #{tpu_custom_call.1} parent=51 // pred_fallthru
          _
        // Predicated region
        $region57: #{tpu_custom_call.1} parent=51 // pred_check
          %p334 = pneg %p94
        $region58: #{tpu_custom_call.1} parent=51 // pred_check_branch
          %336 = sbr.rel (%p334) target = $region60
        $region59: #{tpu_custom_call.1} parent=51 // pred_region
          %337 = dma.done [#allocation10], 2048
        $region60: #{tpu_custom_call.1} parent=51 // pred_fallthru
          _
        %s338 = sand.u32 %s39, 1
        %s339 = scalar_lea.sflag [#allocation7], %s338
        %s340 = sand.u32 %s39, 1
        %s341 = smul.addr %s340, 128
        %s342 = scalar_lea.vmem [#allocation6], %s341
        %p343 = pneg %p52
        %p344 = pneg %p49
        %p345 = pneg %p73
        %p346 = pneg %p70
        %p347 = pneg %p94
        %p348 = pneg %p91
        %p349 = pneg %p115
        %p350 = pneg %p112
        %p351 = pneg %p136
        %p352 = pneg %p133
        %p353 = pneg %p157
        %p354 = pneg %p154
        %p355 = pneg %p178
        %p356 = pneg %p175
        %p357 = pneg %p199
        %p358 = pneg %p196
        %p359 = pneg %p220
        %p360 = pneg %p217
        %p361 = pneg %p246
        %p362 = pneg %p243
        %s363 = sand.u32 %s233, 1
        %s364 = scalar_lea.sflag [#allocation13], %s363
        %s365 = sand.u32 %s233, 1
        %s366 = scalar_lea.vmem [#allocation12], %s365
        %s367 = smul.u32 16, %s31
        %p369 = scmp.eq.s32.totalorder %s31, 0
        // Predicated region
        $region61: #{tpu_custom_call.1} parent=51 // pred_check
          %p370 = pneg %p369
        $region62: #{tpu_custom_call.1} parent=51 // pred_check_branch
          %372 = sbr.rel (%p370) target = $region64
        $region63: #{tpu_custom_call.1} parent=51 // pred_region
          %vm373 = vcmask 0
          %374 = vst.msk [vmem:[#allocation2] sm:$0x1] %vm373, -inf
          %375 = vst.msk [vmem:[#allocation3] sm:$0x1] %vm373, 0.0
          %376 = vst [vmem:[#allocation4] sm:$0x1] 0.0
        $region64: #{tpu_custom_call.1} parent=51 // pred_fallthru
          _
        %v377 = vld [vmem:[%s329] sm:$0xff]
        %v378 = vld [vmem:[%s329 + $0x8] sm:$0xff]
        %v379 = vld [vmem:[%s329 + $0x10] sm:$0xff]
        %v380 = vld [vmem:[%s329 + $0x18] sm:$0xff]
        %v381 = vld [vmem:[%s329 + $0x20] sm:$0xff]
        %v382 = vld [vmem:[%s329 + $0x28] sm:$0xff]
        %v383 = vld [vmem:[%s329 + $0x30] sm:$0xff]
        %v384 = vld [vmem:[%s329 + $0x38] sm:$0xff]
        %v385 = vld [vmem:[%s329 + $0x40] sm:$0xff]
        %v386 = vld [vmem:[%s329 + $0x48] sm:$0xff]
        %v387 = vld [vmem:[%s329 + $0x50] sm:$0xff]
        %v388 = vld [vmem:[%s329 + $0x58] sm:$0xff]
        %v389 = vld [vmem:[%s329 + $0x60] sm:$0xff]
        %v390 = vld [vmem:[%s329 + $0x68] sm:$0xff]
        %v391 = vld [vmem:[%s329 + $0x70] sm:$0xff]
        %v392 = vld [vmem:[%s329 + $0x78] sm:$0xff]
        %v393 = vld [vmem:[%s1] sm:$0xf]
        %v394 = vld [vmem:[%s1 + $0x4] sm:$0xf]
        %v395 = vld [vmem:[%s1 + $0x8] sm:$0xf]
        %v396 = vld [vmem:[%s1 + $0xc] sm:$0xf]
        %v397 = vld [vmem:[%s1 + $0x10] sm:$0xf]
        %v398 = vld [vmem:[%s1 + $0x14] sm:$0xf]
        %v399 = vld [vmem:[%s1 + $0x18] sm:$0xf]
        %v400 = vld [vmem:[%s1 + $0x1c] sm:$0xf]
        %v401 = vld [vmem:[%s1 + $0x20] sm:$0xf]
        %v402 = vld [vmem:[%s1 + $0x24] sm:$0xf]
        %v403 = vld [vmem:[%s1 + $0x28] sm:$0xf]
        %v404 = vld [vmem:[%s1 + $0x2c] sm:$0xf]
        %v405 = vld [vmem:[%s1 + $0x30] sm:$0xf]
        %v406 = vld [vmem:[%s1 + $0x34] sm:$0xf]
        %v407 = vld [vmem:[%s1 + $0x38] sm:$0xf]
        %v408 = vld [vmem:[%s1 + $0x3c] sm:$0xf]
        %v409 = vld [vmem:[%s1 + $0x40] sm:$0xf]
        %v410 = vld [vmem:[%s1 + $0x44] sm:$0xf]
        %v411 = vld [vmem:[%s1 + $0x48] sm:$0xf]
        %v412 = vld [vmem:[%s1 + $0x4c] sm:$0xf]
        %v413 = vld [vmem:[%s1 + $0x50] sm:$0xf]
        %v414 = vld [vmem:[%s1 + $0x54] sm:$0xf]
        %v415 = vld [vmem:[%s1 + $0x58] sm:$0xf]
        %v416 = vld [vmem:[%s1 + $0x5c] sm:$0xf]
        %v417 = vld [vmem:[%s1 + $0x60] sm:$0xf]
        %v418 = vld [vmem:[%s1 + $0x64] sm:$0xf]
        %v419 = vld [vmem:[%s1 + $0x68] sm:$0xf]
        %v420 = vld [vmem:[%s1 + $0x6c] sm:$0xf]
        %v421 = vld [vmem:[%s1 + $0x70] sm:$0xf]
        %v422 = vld [vmem:[%s1 + $0x74] sm:$0xf]
        %v423 = vld [vmem:[%s1 + $0x78] sm:$0xf]
        %v424 = vld [vmem:[%s1 + $0x7c] sm:$0xf]
        %v441 = vunpack.c.l.b16 %v377
        %v442 = vunpack.c.h.b16 %v377
        %v443 = vunpack.c.l.b16 %v378
        %v444 = vunpack.c.h.b16 %v378
        %v445 = vunpack.c.l.b16 %v379
        %v446 = vunpack.c.h.b16 %v379
        %v447 = vunpack.c.l.b16 %v380
        %v448 = vunpack.c.h.b16 %v380
        %v449 = vunpack.c.l.b16 %v381
        %v450 = vunpack.c.h.b16 %v381
        %v451 = vunpack.c.l.b16 %v382
        %v452 = vunpack.c.h.b16 %v382
        %v453 = vunpack.c.l.b16 %v383
        %v454 = vunpack.c.h.b16 %v383
        %v455 = vunpack.c.l.b16 %v384
        %v456 = vunpack.c.h.b16 %v384
        %v457 = vunpack.c.l.b16 %v385
        %v458 = vunpack.c.h.b16 %v385
        %v459 = vunpack.c.l.b16 %v386
        %v460 = vunpack.c.h.b16 %v386
        %v461 = vunpack.c.l.b16 %v387
        %v462 = vunpack.c.h.b16 %v387
        %v463 = vunpack.c.l.b16 %v388
        %v464 = vunpack.c.h.b16 %v388
        %v465 = vunpack.c.l.b16 %v389
        %v466 = vunpack.c.h.b16 %v389
        %v467 = vunpack.c.l.b16 %v390
        %v468 = vunpack.c.h.b16 %v390
        %v469 = vunpack.c.l.b16 %v391
        %v470 = vunpack.c.h.b16 %v391
        %v471 = vunpack.c.l.b16 %v392
        %v472 = vunpack.c.h.b16 %v392
        %v473 = vpack.c.b16 %v443, %v441
        %v474 = vpack.c.b16 %v444, %v442
        %v475 = vpack.c.b16 %v447, %v445
        %v476 = vpack.c.b16 %v448, %v446
        %v477 = vpack.c.b16 %v451, %v449
        %v478 = vpack.c.b16 %v452, %v450
        %v479 = vpack.c.b16 %v455, %v453
        %v480 = vpack.c.b16 %v456, %v454
        %v481 = vpack.c.b16 %v459, %v457
        %v482 = vpack.c.b16 %v460, %v458
        %v483 = vpack.c.b16 %v463, %v461
        %v484 = vpack.c.b16 %v464, %v462
        %v485 = vpack.c.b16 %v467, %v465
        %v486 = vpack.c.b16 %v468, %v466
        %v487 = vpack.c.b16 %v471, %v469
        %v488 = vpack.c.b16 %v472, %v470
        %v537 = vunpack.c.l.b16 %v393
        %v538 = vunpack.c.l.b16 %v394
        %v539 = vunpack.c.l.b16 %v395
        %v540 = vunpack.c.l.b16 %v396
        %v541 = vunpack.c.l.b16 %v397
        %v542 = vunpack.c.l.b16 %v398
        %v543 = vunpack.c.l.b16 %v399
        %v544 = vunpack.c.l.b16 %v400
        %v545 = vunpack.c.l.b16 %v401
        %v546 = vunpack.c.l.b16 %v402
        %v547 = vunpack.c.l.b16 %v403
        %v548 = vunpack.c.l.b16 %v404
        %v549 = vunpack.c.l.b16 %v405
        %v550 = vunpack.c.l.b16 %v406
        %v551 = vunpack.c.l.b16 %v407
        %v552 = vunpack.c.l.b16 %v408
        %v553 = vunpack.c.l.b16 %v409
        %v554 = vunpack.c.l.b16 %v410
        %v555 = vunpack.c.l.b16 %v411
        %v556 = vunpack.c.l.b16 %v412
        %v557 = vunpack.c.l.b16 %v413
        %v558 = vunpack.c.l.b16 %v414
        %v559 = vunpack.c.l.b16 %v415
        %v560 = vunpack.c.l.b16 %v416
        %v561 = vunpack.c.l.b16 %v417
        %v562 = vunpack.c.l.b16 %v418
        %v563 = vunpack.c.l.b16 %v419
        %v564 = vunpack.c.l.b16 %v420
        %v565 = vunpack.c.l.b16 %v421
        %v566 = vunpack.c.l.b16 %v422
        %v567 = vunpack.c.l.b16 %v423
        %v568 = vunpack.c.l.b16 %v424
        %v569 = vpack.c.b16 %v538, %v537
        %v570 = vpack.c.b16 %v540, %v539
        %v571 = vpack.c.b16 %v542, %v541
        %v572 = vpack.c.b16 %v544, %v543
        %v573 = vpack.c.b16 %v546, %v545
        %v574 = vpack.c.b16 %v548, %v547
        %v575 = vpack.c.b16 %v550, %v549
        %v576 = vpack.c.b16 %v552, %v551
        %v577 = vpack.c.b16 %v554, %v553
        %v578 = vpack.c.b16 %v556, %v555
        %v579 = vpack.c.b16 %v558, %v557
        %v580 = vpack.c.b16 %v560, %v559
        %v581 = vpack.c.b16 %v562, %v561
        %v582 = vpack.c.b16 %v564, %v563
        %v583 = vpack.c.b16 %v566, %v565
        %v584 = vpack.c.b16 %v568, %v567
        %601 = vmatprep.subr.bf16.mxu0 0
        %602 = vmatpush1.bf16.msra.mxu0 %v576
        %603 = vmatprep.subr.bf16.mxu0 0
        %604 = vmatpush1.bf16.msra.mxu0 %v575
        %605 = vmatprep.subr.bf16.mxu0 0
        %606 = vmatpush1.bf16.msra.mxu0 %v574
        %607 = vmatprep.subr.bf16.mxu0 0
        %608 = vmatpush1.bf16.msra.mxu0 %v573
        %609 = vmatprep.subr.bf16.mxu0 0
        %610 = vmatpush1.bf16.msra.mxu0 %v572
        %611 = vmatprep.subr.bf16.mxu0 0
        %612 = vmatpush1.bf16.msra.mxu0 %v571
        %613 = vmatprep.subr.bf16.mxu0 0
        %614 = vmatpush1.bf16.msra.mxu0 %v570
        %615 = vmatprep.subr.bf16.mxu0 0
        %616 = vmatpush1.bf16.msra.mxu0 %v569
        %617 = vmatprep.subr.bf16.mxu0 0
        %618 = vmatpush2.bf16.msra.mxu0 %v584
        %619 = vmatprep.subr.bf16.mxu0 0
        %620 = vmatpush2.bf16.msra.mxu0 %v583
        %621 = vmatprep.subr.bf16.mxu0 0
        %622 = vmatpush2.bf16.msra.mxu0 %v582
        %623 = vmatprep.subr.bf16.mxu0 0
        %624 = vmatpush2.bf16.msra.mxu0 %v581
        %625 = vmatprep.subr.bf16.mxu0 0
        %626 = vmatpush2.bf16.msra.mxu0 %v580
        %627 = vmatprep.subr.bf16.mxu0 0
        %628 = vmatpush2.bf16.msra.mxu0 %v579
        %629 = vmatprep.subr.bf16.mxu0 0
        %630 = vmatpush2.bf16.msra.mxu0 %v578
        %631 = vmatprep.subr.bf16.mxu0 0
        %632 = vmatpush2.bf16.msra.mxu0 %v577
        %633 = vmatprep.mubr.bf16.mxu0 %v474
        %634 = vmatmul.mubr.bf16.gmra.mxu0 %v473
        %v635 = vpop.f32.mrf.mxu0
        %v636 = vadd.f32 0.0, %v635
        %v637 = vpop.f32.mrf.mxu0
        %v638 = vpop.f32.mrf.mxu0
        %v639 = vadd.f32 0.0, %v638
        %v640 = vpop.f32.mrf.mxu0
        %641 = vmatprep.mubr.bf16.mxu0 %v476
        %642 = vmatmul.mubr.bf16.gmra.mxu0 %v475
        %v643 = vpop.f32.mrf.mxu0
        %v644 = vadd.f32 0.0, %v643
        %v645 = vpop.f32.mrf.mxu0
        %v646 = vpop.f32.mrf.mxu0
        %v647 = vadd.f32 0.0, %v646
        %v648 = vpop.f32.mrf.mxu0
        %649 = vmatprep.mubr.bf16.mxu0 %v478
        %650 = vmatmul.mubr.bf16.gmra.mxu0 %v477
        %v651 = vpop.f32.mrf.mxu0
        %v652 = vadd.f32 0.0, %v651
        %v653 = vpop.f32.mrf.mxu0
        %v654 = vpop.f32.mrf.mxu0
        %v655 = vadd.f32 0.0, %v654
        %v656 = vpop.f32.mrf.mxu0
        %657 = vmatprep.mubr.bf16.mxu0 %v480
        %658 = vmatmul.mubr.bf16.gmra.mxu0 %v479
        %v659 = vpop.f32.mrf.mxu0
        %v660 = vadd.f32 0.0, %v659
        %v661 = vpop.f32.mrf.mxu0
        %v662 = vpop.f32.mrf.mxu0
        %v663 = vadd.f32 0.0, %v662
        %v664 = vpop.f32.mrf.mxu0
        %665 = vmatprep.mubr.bf16.mxu0 %v482
        %666 = vmatmul.mubr.bf16.gmra.mxu0 %v481
        %v667 = vpop.f32.mrf.mxu0
        %v668 = vadd.f32 0.0, %v667
        %v669 = vpop.f32.mrf.mxu0
        %v670 = vpop.f32.mrf.mxu0
        %v671 = vadd.f32 0.0, %v670
        %v672 = vpop.f32.mrf.mxu0
        %673 = vmatprep.mubr.bf16.mxu0 %v484
        %674 = vmatmul.mubr.bf16.gmra.mxu0 %v483
        %v675 = vpop.f32.mrf.mxu0
        %v676 = vadd.f32 0.0, %v675
        %v677 = vpop.f32.mrf.mxu0
        %v678 = vpop.f32.mrf.mxu0
        %v679 = vadd.f32 0.0, %v678
        %v680 = vpop.f32.mrf.mxu0
        %681 = vmatprep.mubr.bf16.mxu0 %v486
        %682 = vmatmul.mubr.bf16.gmra.mxu0 %v485
        %v683 = vpop.f32.mrf.mxu0
        %v684 = vadd.f32 0.0, %v683
        %v685 = vpop.f32.mrf.mxu0
        %v686 = vpop.f32.mrf.mxu0
        %v687 = vadd.f32 0.0, %v686
        %v688 = vpop.f32.mrf.mxu0
        %689 = vmatprep.mubr.bf16.mxu0 %v488
        %690 = vmatmul.mubr.bf16.gmra.mxu0 %v487
        %v691 = vpop.f32.mrf.mxu0
        %v692 = vadd.f32 0.0, %v691
        %v693 = vpop.f32.mrf.mxu0
        %v694 = vpop.f32.mrf.mxu0
        %v695 = vadd.f32 0.0, %v694
        %v696 = vpop.f32.mrf.mxu0
        %697 = vdwg.mxu0
        %v698 = vmax.f32 %v636, 0.0
        %v699 = vmax.f32 %v639, 0.0
        %v700 = vmax.f32 %v644, 0.0
        %v701 = vmax.f32 %v647, 0.0
        %v702 = vmax.f32 %v652, 0.0
        %v703 = vmax.f32 %v655, 0.0
        %v704 = vmax.f32 %v660, 0.0
        %v705 = vmax.f32 %v663, 0.0
        %v706 = vmax.f32 %v668, 0.0
        %v707 = vmax.f32 %v671, 0.0
        %v708 = vmax.f32 %v676, 0.0
        %v709 = vmax.f32 %v679, 0.0
        %v710 = vmax.f32 %v684, 0.0
        %v711 = vmax.f32 %v687, 0.0
        %v712 = vmax.f32 %v692, 0.0
        %v713 = vmax.f32 %v695, 0.0
        %v714 = vpack.c.bf16 %v699, %v698
        %v715 = vpack.c.bf16 %v701, %v700
        %v716 = vpack.c.bf16 %v703, %v702
        %v717 = vpack.c.bf16 %v705, %v704
        %v718 = vpack.c.bf16 %v707, %v706
        %v719 = vpack.c.bf16 %v709, %v708
        %v720 = vpack.c.bf16 %v711, %v710
        %v721 = vpack.c.bf16 %v713, %v712
        %v722 = vld [vmem:[#allocation9] sm:$0xff]
        %v723 = vld [vmem:[#allocation9 + $0x8] sm:$0xff]
        %v724 = vld [vmem:[#allocation9 + $0x10] sm:$0xff]
        %v725 = vld [vmem:[#allocation9 + $0x18] sm:$0xff]
        %v726 = vld [vmem:[#allocation9 + $0x20] sm:$0xff]
        %v727 = vld [vmem:[#allocation9 + $0x28] sm:$0xff]
        %v728 = vld [vmem:[#allocation9 + $0x30] sm:$0xff]
        %v729 = vld [vmem:[#allocation9 + $0x38] sm:$0xff]
        %v730 = vld [vmem:[#allocation9 + $0x40] sm:$0xff]
        %v731 = vld [vmem:[#allocation9 + $0x48] sm:$0xff]
        %v732 = vld [vmem:[#allocation9 + $0x50] sm:$0xff]
        %v733 = vld [vmem:[#allocation9 + $0x58] sm:$0xff]
        %v734 = vld [vmem:[#allocation9 + $0x60] sm:$0xff]
        %v735 = vld [vmem:[#allocation9 + $0x68] sm:$0xff]
        %v736 = vld [vmem:[#allocation9 + $0x70] sm:$0xff]
        %v737 = vld [vmem:[#allocation9 + $0x78] sm:$0xff]
        %v738 = vld [vmem:[%s3] sm:$0x3]
        %v740 = vlaneseq
        %v741 = vshrl.u32 %v740, 7
        %v742 = vsub.s32 0, %v741
        %v743 = vrot.slane %v738, %v742
        %v744 = vlaneseq
        %v745 = vshrl.u32 %v744, 7
        %v746 = vsub.s32 1, %v745
        %v747 = vrot.slane %v738, %v746
        %v766 = vunpack.c.l.b16 %v722
        %v767 = vunpack.c.h.b16 %v722
        %v768 = vunpack.c.l.b16 %v723
        %v769 = vunpack.c.h.b16 %v723
        %v770 = vunpack.c.l.b16 %v724
        %v771 = vunpack.c.h.b16 %v724
        %v772 = vunpack.c.l.b16 %v725
        %v773 = vunpack.c.h.b16 %v725
        %v774 = vunpack.c.l.b16 %v726
        %v775 = vunpack.c.h.b16 %v726
        %v776 = vunpack.c.l.b16 %v727
        %v777 = vunpack.c.h.b16 %v727
        %v778 = vunpack.c.l.b16 %v728
        %v779 = vunpack.c.h.b16 %v728
        %v780 = vunpack.c.l.b16 %v729
        %v781 = vunpack.c.h.b16 %v729
        %v782 = vunpack.c.l.b16 %v730
        %v783 = vunpack.c.h.b16 %v730
        %v784 = vunpack.c.l.b16 %v731
        %v785 = vunpack.c.h.b16 %v731
        %v786 = vunpack.c.l.b16 %v732
        %v787 = vunpack.c.h.b16 %v732
        %v788 = vunpack.c.l.b16 %v733
        %v789 = vunpack.c.h.b16 %v733
        %v790 = vunpack.c.l.b16 %v734
        %v791 = vunpack.c.h.b16 %v734
        %v792 = vunpack.c.l.b16 %v735
        %v793 = vunpack.c.h.b16 %v735
        %v794 = vunpack.c.l.b16 %v736
        %v795 = vunpack.c.h.b16 %v736
        %v796 = vunpack.c.l.b16 %v737
        %v797 = vunpack.c.h.b16 %v737
        %v798 = vpack.c.b16 %v768, %v766
        %v799 = vpack.c.b16 %v769, %v767
        %v800 = vpack.c.b16 %v772, %v770
        %v801 = vpack.c.b16 %v773, %v771
        %v802 = vpack.c.b16 %v776, %v774
        %v803 = vpack.c.b16 %v777, %v775
        %v804 = vpack.c.b16 %v780, %v778
        %v805 = vpack.c.b16 %v781, %v779
        %v806 = vpack.c.b16 %v784, %v782
        %v807 = vpack.c.b16 %v785, %v783
        %v808 = vpack.c.b16 %v788, %v786
        %v809 = vpack.c.b16 %v789, %v787
        %v810 = vpack.c.b16 %v792, %v790
        %v811 = vpack.c.b16 %v793, %v791
        %v812 = vpack.c.b16 %v796, %v794
        %v813 = vpack.c.b16 %v797, %v795
        %830 = vmatprep.subr.bf16.mxu0 %v813
        %831 = vmatpush1.bf16.msra.mxu0 %v812
        %832 = vmatprep.subr.bf16.mxu0 %v811
        %833 = vmatpush1.bf16.msra.mxu0 %v810
        %834 = vmatprep.subr.bf16.mxu0 %v809
        %835 = vmatpush1.bf16.msra.mxu0 %v808
        %836 = vmatprep.subr.bf16.mxu0 %v807
        %837 = vmatpush1.bf16.msra.mxu0 %v806
        %838 = vmatprep.subr.bf16.mxu0 %v805
        %839 = vmatpush1.bf16.msra.mxu0 %v804
        %840 = vmatprep.subr.bf16.mxu0 %v803
        %841 = vmatpush1.bf16.msra.mxu0 %v802
        %842 = vmatprep.subr.bf16.mxu0 %v801
        %843 = vmatpush1.bf16.msra.mxu0 %v800
        %844 = vmatprep.subr.bf16.mxu0 %v799
        %845 = vmatpush1.bf16.msra.mxu0 %v798
        %846 = vmatprep.subr.bf16.mxu0 0
        %847 = vmatpush2.bf16.msra.mxu0 0
        %848 = vmatprep.subr.bf16.mxu0 0
        %849 = vmatpush2.bf16.msra.mxu0 0
        %850 = vmatprep.subr.bf16.mxu0 0
        %851 = vmatpush2.bf16.msra.mxu0 0
        %852 = vmatprep.subr.bf16.mxu0 0
        %853 = vmatpush2.bf16.msra.mxu0 0
        %854 = vmatprep.subr.bf16.mxu0 0
        %855 = vmatpush2.bf16.msra.mxu0 0
        %856 = vmatprep.subr.bf16.mxu0 0
        %857 = vmatpush2.bf16.msra.mxu0 0
        %858 = vmatprep.subr.bf16.mxu0 0
        %859 = vmatpush2.bf16.msra.mxu0 0
        %860 = vmatprep.subr.bf16.mxu0 0
        %861 = vmatpush2.bf16.msra.mxu0 0
        %862 = vmatprep.mubr.bf16.mxu0 0
        %863 = vmatmul.mubr.bf16.gmra.mxu0 %v714
        %v864 = vpop.f32.mrf.mxu0
        %v865 = vadd.f32 %v743, %v864
        %v866 = vpop.f32.mrf.mxu0
        %v867 = vadd.f32 %v747, %v866
        %v868 = vpop.f32.mrf.mxu0
        %v869 = vadd.f32 %v743, %v868
        %v870 = vpop.f32.mrf.mxu0
        %v871 = vadd.f32 %v747, %v870
        %872 = vmatprep.mubr.bf16.mxu0 0
        %873 = vmatmul.mubr.bf16.gmra.mxu0 %v715
        %v874 = vpop.f32.mrf.mxu0
        %v875 = vadd.f32 %v743, %v874
        %v876 = vpop.f32.mrf.mxu0
        %v877 = vadd.f32 %v747, %v876
        %v878 = vpop.f32.mrf.mxu0
        %v879 = vadd.f32 %v743, %v878
        %v880 = vpop.f32.mrf.mxu0
        %v881 = vadd.f32 %v747, %v880
        %882 = vmatprep.mubr.bf16.mxu0 0
        %883 = vmatmul.mubr.bf16.gmra.mxu0 %v716
        %v884 = vpop.f32.mrf.mxu0
        %v885 = vadd.f32 %v743, %v884
        %v886 = vpop.f32.mrf.mxu0
        %v887 = vadd.f32 %v747, %v886
        %v888 = vpop.f32.mrf.mxu0
        %v889 = vadd.f32 %v743, %v888
        %v890 = vpop.f32.mrf.mxu0
        %v891 = vadd.f32 %v747, %v890
        %892 = vmatprep.mubr.bf16.mxu0 0
        %893 = vmatmul.mubr.bf16.gmra.mxu0 %v717
        %v894 = vpop.f32.mrf.mxu0
        %v895 = vadd.f32 %v743, %v894
        %v896 = vpop.f32.mrf.mxu0
        %v897 = vadd.f32 %v747, %v896
        %v898 = vpop.f32.mrf.mxu0
        %v899 = vadd.f32 %v743, %v898
        %v900 = vpop.f32.mrf.mxu0
        %v901 = vadd.f32 %v747, %v900
        %902 = vmatprep.mubr.bf16.mxu0 0
        %903 = vmatmul.mubr.bf16.gmra.mxu0 %v718
        %v904 = vpop.f32.mrf.mxu0
        %v905 = vadd.f32 %v743, %v904
        %v906 = vpop.f32.mrf.mxu0
        %v907 = vadd.f32 %v747, %v906
        %v908 = vpop.f32.mrf.mxu0
        %v909 = vadd.f32 %v743, %v908
        %v910 = vpop.f32.mrf.mxu0
        %v911 = vadd.f32 %v747, %v910
        %912 = vmatprep.mubr.bf16.mxu0 0
        %913 = vmatmul.mubr.bf16.gmra.mxu0 %v719
        %v914 = vpop.f32.mrf.mxu0
        %v915 = vadd.f32 %v743, %v914
        %v916 = vpop.f32.mrf.mxu0
        %v917 = vadd.f32 %v747, %v916
        %v918 = vpop.f32.mrf.mxu0
        %v919 = vadd.f32 %v743, %v918
        %v920 = vpop.f32.mrf.mxu0
        %v921 = vadd.f32 %v747, %v920
        %922 = vmatprep.mubr.bf16.mxu0 0
        %923 = vmatmul.mubr.bf16.gmra.mxu0 %v720
        %v924 = vpop.f32.mrf.mxu0
        %v925 = vadd.f32 %v743, %v924
        %v926 = vpop.f32.mrf.mxu0
        %v927 = vadd.f32 %v747, %v926
        %v928 = vpop.f32.mrf.mxu0
        %v929 = vadd.f32 %v743, %v928
        %v930 = vpop.f32.mrf.mxu0
        %v931 = vadd.f32 %v747, %v930
        %932 = vmatprep.mubr.bf16.mxu0 0
        %933 = vmatmul.mubr.bf16.gmra.mxu0 %v721
        %v934 = vpop.f32.mrf.mxu0
        %v935 = vadd.f32 %v743, %v934
        %v936 = vpop.f32.mrf.mxu0
        %v937 = vadd.f32 %v747, %v936
        %v938 = vpop.f32.mrf.mxu0
        %v939 = vadd.f32 %v743, %v938
        %v940 = vpop.f32.mrf.mxu0
        %v941 = vadd.f32 %v747, %v940
        %942 = vdwg.mxu0
        %v943 = vtanh.pop %v865
        %v944 = vtanh.pop %v869
        %v945 = vtanh.pop %v875
        %v946 = vtanh.pop %v879
        %v947 = vtanh.pop %v885
        %v948 = vtanh.pop %v889
        %v949 = vtanh.pop %v895
        %v950 = vtanh.pop %v899
        %v951 = vtanh.pop %v905
        %v952 = vtanh.pop %v909
        %v953 = vtanh.pop %v915
        %v954 = vtanh.pop %v919
        %v955 = vtanh.pop %v925
        %v956 = vtanh.pop %v929
        %v957 = vtanh.pop %v935
        %v958 = vtanh.pop %v939
        %v959 = vxor.u32 %v867, 2147483648
        %v960 = vxor.u32 %v871, 2147483648
        %v961 = vxor.u32 %v877, 2147483648
        %v962 = vxor.u32 %v881, 2147483648
        %v963 = vxor.u32 %v887, 2147483648
        %v964 = vxor.u32 %v891, 2147483648
        %v965 = vxor.u32 %v897, 2147483648
        %v966 = vxor.u32 %v901, 2147483648
        %v967 = vxor.u32 %v907, 2147483648
        %v968 = vxor.u32 %v911, 2147483648
        %v969 = vxor.u32 %v917, 2147483648
        %v970 = vxor.u32 %v921, 2147483648
        %v971 = vxor.u32 %v927, 2147483648
        %v972 = vxor.u32 %v931, 2147483648
        %v973 = vxor.u32 %v937, 2147483648
        %v974 = vxor.u32 %v941, 2147483648
        %v975 = vmul.f32 %v959, 1.442695
        %v976 = vpow.pop %v975
        %v977 = vmul.f32 %v960, 1.442695
        %v978 = vpow.pop %v977
        %v979 = vmul.f32 %v961, 1.442695
        %v980 = vpow.pop %v979
        %v981 = vmul.f32 %v962, 1.442695
        %v982 = vpow.pop %v981
        %v983 = vmul.f32 %v963, 1.442695
        %v984 = vpow.pop %v983
        %v985 = vmul.f32 %v964, 1.442695
        %v986 = vpow.pop %v985
        %v987 = vmul.f32 %v965, 1.442695
        %v988 = vpow.pop %v987
        %v989 = vmul.f32 %v966, 1.442695
        %v990 = vpow.pop %v989
        %v991 = vmul.f32 %v967, 1.442695
        %v992 = vpow.pop %v991
        %v993 = vmul.f32 %v968, 1.442695
        %v994 = vpow.pop %v993
        %v995 = vmul.f32 %v969, 1.442695
        %v996 = vpow.pop %v995
        %v997 = vmul.f32 %v970, 1.442695
        %v998 = vpow.pop %v997
        %v999 = vmul.f32 %v971, 1.442695
        %v1000 = vpow.pop %v999
        %v1001 = vmul.f32 %v972, 1.442695
        %v1002 = vpow.pop %v1001
        %v1003 = vmul.f32 %v973, 1.442695
        %v1004 = vpow.pop %v1003
        %v1005 = vmul.f32 %v974, 1.442695
        %v1006 = vpow.pop %v1005
        %v1007 = vadd.f32 %v976, 1.0
        %v1008 = vadd.f32 %v978, 1.0
        %v1009 = vadd.f32 %v980, 1.0
        %v1010 = vadd.f32 %v982, 1.0
        %v1011 = vadd.f32 %v984, 1.0
        %v1012 = vadd.f32 %v986, 1.0
        %v1013 = vadd.f32 %v988, 1.0
        %v1014 = vadd.f32 %v990, 1.0
        %v1015 = vadd.f32 %v992, 1.0
        %v1016 = vadd.f32 %v994, 1.0
        %v1017 = vadd.f32 %v996, 1.0
        %v1018 = vadd.f32 %v998, 1.0
        %v1019 = vadd.f32 %v1000, 1.0
        %v1020 = vadd.f32 %v1002, 1.0
        %v1021 = vadd.f32 %v1004, 1.0
        %v1022 = vadd.f32 %v1006, 1.0
        %v1023 = vrcp.pop %v1007
        %v1024 = vmul.f32 1.0, %v1023
        %v1025 = vrcp.pop %v1008
        %v1026 = vmul.f32 1.0, %v1025
        %v1027 = vrcp.pop %v1009
        %v1028 = vmul.f32 1.0, %v1027
        %v1029 = vrcp.pop %v1010
        %v1030 = vmul.f32 1.0, %v1029
        %v1031 = vrcp.pop %v1011
        %v1032 = vmul.f32 1.0, %v1031
        %v1033 = vrcp.pop %v1012
        %v1034 = vmul.f32 1.0, %v1033
        %v1035 = vrcp.pop %v1013
        %v1036 = vmul.f32 1.0, %v1035
        %v1037 = vrcp.pop %v1014
        %v1038 = vmul.f32 1.0, %v1037
        %v1039 = vrcp.pop %v1015
        %v1040 = vmul.f32 1.0, %v1039
        %v1041 = vrcp.pop %v1016
        %v1042 = vmul.f32 1.0, %v1041
        %v1043 = vrcp.pop %v1017
        %v1044 = vmul.f32 1.0, %v1043
        %v1045 = vrcp.pop %v1018
        %v1046 = vmul.f32 1.0, %v1045
        %v1047 = vrcp.pop %v1019
        %v1048 = vmul.f32 1.0, %v1047
        %v1049 = vrcp.pop %v1020
        %v1050 = vmul.f32 1.0, %v1049
        %v1051 = vrcp.pop %v1021
        %v1052 = vmul.f32 1.0, %v1051
        %v1053 = vrcp.pop %v1022
        %v1054 = vmul.f32 1.0, %v1053
        %v1055 = vmul.f32 %v943, %v1024
        %v1056 = vmul.f32 %v944, %v1026
        %v1057 = vmul.f32 %v945, %v1028
        %v1058 = vmul.f32 %v946, %v1030
        %v1059 = vmul.f32 %v947, %v1032
        %v1060 = vmul.f32 %v948, %v1034
        %v1061 = vmul.f32 %v949, %v1036
        %v1062 = vmul.f32 %v950, %v1038
        %v1063 = vmul.f32 %v951, %v1040
        %v1064 = vmul.f32 %v952, %v1042
        %v1065 = vmul.f32 %v953, %v1044
        %v1066 = vmul.f32 %v954, %v1046
        %v1067 = vmul.f32 %v955, %v1048
        %v1068 = vmul.f32 %v956, %v1050
        %v1069 = vmul.f32 %v957, %v1052
        %v1070 = vmul.f32 %v958, %v1054
        %v1071 = vld [vmem:[%s4] sm:$0x1]
        %v1072 = vld [vmem:[#allocation5] sm:$0x1]
        %1074 = vset.pattern.permute.xlu0 0
        %1075 = vperm.xlu0 %1074, %v1072
        %v1076 = vpop.permute.xlu0 %1075
        %v1078 = vlaneseq
        %v1079 = vshrl.u32 %v1078, 7
        %v1080 = vsub.s32 0, %v1079
        %v1081 = vrot.slane %v1076, %v1080
        %1082 = vmatprep.subr.mxu0 0.0
        %1083 = vmatpush1.xpose.msra.mxu0 %v1070
        %1084 = vmatprep.subr.mxu0 0.0
        %1085 = vmatpush1.xpose.msra.mxu0 %v1069
        %1086 = vmatprep.subr.mxu0 0.0
        %1087 = vmatpush1.xpose.msra.mxu0 %v1068
        %1088 = vmatprep.subr.mxu0 0.0
        %1089 = vmatpush1.xpose.msra.mxu0 %v1067
        %1090 = vmatprep.subr.mxu0 0.0
        %1091 = vmatpush1.xpose.msra.mxu0 %v1066
        %1092 = vmatprep.subr.mxu0 0.0
        %1093 = vmatpush1.xpose.msra.mxu0 %v1065
        %1094 = vmatprep.subr.mxu0 0.0
        %1095 = vmatpush1.xpose.msra.mxu0 %v1064
        %1096 = vmatprep.subr.mxu0 0.0
        %1097 = vmatpush1.xpose.msra.mxu0 %v1063
        %1098 = vmatprep.subr.mxu0 0.0
        %1099 = vmatpush1.xpose.msra.mxu0 %v1062
        %1100 = vmatprep.subr.mxu0 0.0
        %1101 = vmatpush1.xpose.msra.mxu0 %v1061
        %1102 = vmatprep.subr.mxu0 0.0
        %1103 = vmatpush1.xpose.msra.mxu0 %v1060
        %1104 = vmatprep.subr.mxu0 0.0
        %1105 = vmatpush1.xpose.msra.mxu0 %v1059
        %1106 = vmatprep.subr.mxu0 0.0
        %1107 = vmatpush1.xpose.msra.mxu0 %v1058
        %1108 = vmatprep.subr.mxu0 0.0
        %1109 = vmatpush1.xpose.msra.mxu0 %v1057
        %1110 = vmatprep.subr.mxu0 0.0
        %1111 = vmatpush1.xpose.msra.mxu0 %v1056
        %1112 = vmatprep.subr.mxu0 0.0
        %1113 = vmatpush1.xpose.msra.mxu0 %v1055
        %1114 = vmatprep.subr.mxu0 0.0
        %1115 = vmatpush2.xpose.msra.mxu0 0.0
        %1116 = vmatprep.subr.mxu0 0.0
        %1117 = vmatpush2.xpose.msra.mxu0 0.0
        %1118 = vmatprep.subr.mxu0 0.0
        %1119 = vmatpush2.xpose.msra.mxu0 0.0
        %1120 = vmatprep.subr.mxu0 0.0
        %1121 = vmatpush2.xpose.msra.mxu0 0.0
        %1122 = vmatprep.subr.mxu0 0.0
        %1123 = vmatpush2.xpose.msra.mxu0 0.0
        %1124 = vmatprep.subr.mxu0 0.0
        %1125 = vmatpush2.xpose.msra.mxu0 0.0
        %1126 = vmatprep.subr.mxu0 0.0
        %1127 = vmatpush2.xpose.msra.mxu0 0.0
        %1128 = vmatprep.subr.mxu0 0.0
        %1129 = vmatpush2.xpose.msra.mxu0 0.0
        %1130 = vmatprep.subr.mxu0 0.0
        %1131 = vmatpush2.xpose.msra.mxu0 0.0
        %1132 = vmatprep.subr.mxu0 0.0
        %1133 = vmatpush2.xpose.msra.mxu0 0.0
        %1134 = vmatprep.subr.mxu0 0.0
        %1135 = vmatpush2.xpose.msra.mxu0 0.0
        %1136 = vmatprep.subr.mxu0 0.0
        %1137 = vmatpush2.xpose.msra.mxu0 0.0
        %1138 = vmatprep.subr.mxu0 0.0
        %1139 = vmatpush2.xpose.msra.mxu0 0.0
        %1140 = vmatprep.subr.mxu0 0.0
        %1141 = vmatpush2.xpose.msra.mxu0 0.0
        %1142 = vmatprep.subr.mxu0 0.0
        %1143 = vmatpush2.xpose.msra.mxu0 0.0
        %1144 = vmatprep.subr.mxu0 0.0
        %1145 = vmatpush2.xpose.msra.mxu0 0.0
        %1146 = vmatprep.mubr.f32.mxu0 0.0
        %1147 = vmatmul.mubr.f32.gmra.mxu0 %v1071
        %v1148 = vpop.f32.mrf.mxu0
        %v1149 = vadd.f32 %v1081, %v1148
        %v1150 = vpop.f32.mrf.mxu0
        %1151 = vdwg.mxu0
        %1152 = vst [vmem:[%s366] sm:$0x1] %v1149
        %s1153 = smul.u32 %s31, 128
        %v1154 = vlaneseq
        %v1155 = vand.u32 %v1154, 127
        %v1156 = vstv %s1153
        %v1157 = vadd.s32 %v1156, %v1155
        %vm1158 = vcmp.lt.s32.totalorder %v1157, 300
        %v1159 = vsel %vm1158, %v1149, -inf
        %v1160 = vld [vmem:[#allocation2] sm:$0x1]
        %vm1161 = vcmask 1040384
        %v1162 = vsel %vm1161, %v1159, -inf
        %1163 = vmax.xlane.f32.xlu0 %v1162
        %v1164 = vpop.xlane.xlu0 %1163
        %v1165 = vmax.f32 %v1160, %v1164
        %v1166 = vsub.f32 %v1160, %v1165
        %v1167 = vmul.f32 %v1166, 1.442695
        %v1168 = vpow.pop %v1167
        %1170 = vset.pattern.permute.xlu0 0
        %1171 = vperm.xlu0 %1170, %v1165
        %v1172 = vpop.permute.xlu0 %1171
        %v1174 = vlaneseq
        %v1175 = vshrl.u32 %v1174, 7
        %v1176 = vsub.s32 0, %v1175
        %v1177 = vrot.slane %v1172, %v1176
        %v1178 = vsub.f32 %v1159, %v1177
        %v1179 = vmul.f32 %v1178, 1.442695
        %v1180 = vpow.pop %v1179
        %v1181 = vld [vmem:[#allocation3] sm:$0x1]
        %v1182 = vmul.f32 %v1168, %v1181
        %v1183 = vsel %vm1161, %v1180, 0.0
        %1184 = vadd.xlane.f32.xlu0 %v1183
        %v1185 = vpop.xlane.xlu0 %1184
        %v1186 = vadd.f32 %v1182, %v1185
        %vm1187 = vcmask 0
        %1188 = vst.msk [vmem:[#allocation3] sm:$0x1] %vm1187, %v1186
        %v1189 = vld [vmem:[#allocation4] sm:$0x1]
        %1191 = vset.pattern.permute.xlu0 0
        %1192 = vperm.xlu0 %1191, %v1168
        %v1193 = vpop.permute.xlu0 %1192
        %v1195 = vlaneseq
        %v1196 = vshrl.u32 %v1195, 7
        %v1197 = vsub.s32 0, %v1196
        %v1198 = vrot.slane %v1193, %v1197
        %v1199 = vmul.f32 %v1198, %v1189
        %v1200 = vpack.c.bf16 %v1180, %v1180
        %1201 = vmatprep.subr.bf16.mxu0 0
        %1202 = vmatpush1.bf16.msra.mxu0 %v721
        %1203 = vmatprep.subr.bf16.mxu0 0
        %1204 = vmatpush1.bf16.msra.mxu0 %v720
        %1205 = vmatprep.subr.bf16.mxu0 0
        %1206 = vmatpush1.bf16.msra.mxu0 %v719
        %1207 = vmatprep.subr.bf16.mxu0 0
        %1208 = vmatpush1.bf16.msra.mxu0 %v718
        %1209 = vmatprep.subr.bf16.mxu0 0
        %1210 = vmatpush1.bf16.msra.mxu0 %v717
        %1211 = vmatprep.subr.bf16.mxu0 0
        %1212 = vmatpush1.bf16.msra.mxu0 %v716
        %1213 = vmatprep.subr.bf16.mxu0 0
        %1214 = vmatpush1.bf16.msra.mxu0 %v715
        %1215 = vmatprep.subr.bf16.mxu0 0
        %1216 = vmatpush1.bf16.msra.mxu0 %v714
        %1217 = vmatprep.subr.bf16.mxu0 0
        %1218 = vmatpush2.bf16.msra.mxu0 0
        %1219 = vmatprep.subr.bf16.mxu0 0
        %1220 = vmatpush2.bf16.msra.mxu0 0
        %1221 = vmatprep.subr.bf16.mxu0 0
        %1222 = vmatpush2.bf16.msra.mxu0 0
        %1223 = vmatprep.subr.bf16.mxu0 0
        %1224 = vmatpush2.bf16.msra.mxu0 0
        %1225 = vmatprep.subr.bf16.mxu0 0
        %1226 = vmatpush2.bf16.msra.mxu0 0
        %1227 = vmatprep.subr.bf16.mxu0 0
        %1228 = vmatpush2.bf16.msra.mxu0 0
        %1229 = vmatprep.subr.bf16.mxu0 0
        %1230 = vmatpush2.bf16.msra.mxu0 0
        %1231 = vmatprep.subr.bf16.mxu0 0
        %1232 = vmatpush2.bf16.msra.mxu0 0
        %1233 = vmatprep.mubr.bf16.mxu0 0
        %1234 = vmatmul.mubr.bf16.gmra.mxu0 %v1200
        %v1235 = vpop.f32.mrf.mxu0
        %v1236 = vadd.f32 0.0, %v1235
        %v1237 = vpop.f32.mrf.mxu0
        %v1238 = vpop.f32.mrf.mxu0
        %v1239 = vpop.f32.mrf.mxu0
        %1240 = vdwg.mxu0
        %v1241 = vadd.f32 %v1199, %v1236
        %1242 = vst [vmem:[#allocation4] sm:$0x1] %v1241
        %1243 = vst.msk [vmem:[#allocation2] sm:$0x1] %vm1187, %v1165
        %p1244 = scmp.eq.s32.totalorder %s31, 2
        // Predicated region
        $region65: #{tpu_custom_call.1} parent=51 // pred_check
          %p1245 = pneg %p1244
        $region66: #{tpu_custom_call.1} parent=51 // pred_check_branch
          %1247 = sbr.rel (%p1245) target = $region68
        $region67: #{tpu_custom_call.1} parent=51 // pred_region
          %v1248 = vld [vmem:[#allocation4] sm:$0x1]
          %v1249 = vld [vmem:[#allocation3] sm:$0x1]
          %1251 = vset.pattern.permute.xlu0 0
          %1252 = vperm.xlu0 %1251, %v1249
          %v1253 = vpop.permute.xlu0 %1252
          %v1255 = vlaneseq
          %v1256 = vshrl.u32 %v1255, 7
          %v1257 = vsub.s32 0, %v1256
          %v1258 = vrot.slane %v1253, %v1257
          %v1259 = vrcp.pop %v1258
          %v1260 = vmul.f32 %v1248, %v1259
          %v1261 = vld [vmem:[%s6] sm:$0xff]
          %v1262 = vld [vmem:[%s6 + $0x8] sm:$0xff]
          %v1263 = vld [vmem:[%s6 + $0x10] sm:$0xff]
          %v1264 = vld [vmem:[%s6 + $0x18] sm:$0xff]
          %v1265 = vld [vmem:[%s6 + $0x20] sm:$0xff]
          %v1266 = vld [vmem:[%s6 + $0x28] sm:$0xff]
          %v1267 = vld [vmem:[%s6 + $0x30] sm:$0xff]
          %v1268 = vld [vmem:[%s6 + $0x38] sm:$0xff]
          %v1269 = vld [vmem:[%s6 + $0x40] sm:$0xff]
          %v1270 = vld [vmem:[%s6 + $0x48] sm:$0xff]
          %v1271 = vld [vmem:[%s6 + $0x50] sm:$0xff]
          %v1272 = vld [vmem:[%s6 + $0x58] sm:$0xff]
          %v1273 = vld [vmem:[%s6 + $0x60] sm:$0xff]
          %v1274 = vld [vmem:[%s6 + $0x68] sm:$0xff]
          %v1275 = vld [vmem:[%s6 + $0x70] sm:$0xff]
          %v1276 = vld [vmem:[%s6 + $0x78] sm:$0xff]
          %v1277 = vld [vmem:[%s7] sm:$0x1]
          %1278 = vmatprep.subr.mxu0 0.0
          %1279 = vmatpush1.msra.mxu0 %v1276
          %1280 = vmatprep.subr.mxu0 0.0
          %1281 = vmatpush1.msra.mxu0 %v1275
          %1282 = vmatprep.subr.mxu0 0.0
          %1283 = vmatpush1.msra.mxu0 %v1274
          %1284 = vmatprep.subr.mxu0 0.0
          %1285 = vmatpush1.msra.mxu0 %v1273
          %1286 = vmatprep.subr.mxu0 0.0
          %1287 = vmatpush1.msra.mxu0 %v1272
          %1288 = vmatprep.subr.mxu0 0.0
          %1289 = vmatpush1.msra.mxu0 %v1271
          %1290 = vmatprep.subr.mxu0 0.0
          %1291 = vmatpush1.msra.mxu0 %v1270
          %1292 = vmatprep.subr.mxu0 0.0
          %1293 = vmatpush1.msra.mxu0 %v1269
          %1294 = vmatprep.subr.mxu0 0.0
          %1295 = vmatpush1.msra.mxu0 %v1268
          %1296 = vmatprep.subr.mxu0 0.0
          %1297 = vmatpush1.msra.mxu0 %v1267
          %1298 = vmatprep.subr.mxu0 0.0
          %1299 = vmatpush1.msra.mxu0 %v1266
          %1300 = vmatprep.subr.mxu0 0.0
          %1301 = vmatpush1.msra.mxu0 %v1265
          %1302 = vmatprep.subr.mxu0 0.0
          %1303 = vmatpush1.msra.mxu0 %v1264
          %1304 = vmatprep.subr.mxu0 0.0
          %1305 = vmatpush1.msra.mxu0 %v1263
          %1306 = vmatprep.subr.mxu0 0.0
          %1307 = vmatpush1.msra.mxu0 %v1262
          %1308 = vmatprep.subr.mxu0 0.0
          %1309 = vmatpush1.msra.mxu0 %v1261
          %1310 = vmatprep.subr.mxu0 0.0
          %1311 = vmatpush2.msra.mxu0 0.0
          %1312 = vmatprep.subr.mxu0 0.0
          %1313 = vmatpush2.msra.mxu0 0.0
          %1314 = vmatprep.subr.mxu0 0.0
          %1315 = vmatpush2.msra.mxu0 0.0
          %1316 = vmatprep.subr.mxu0 0.0
          %1317 = vmatpush2.msra.mxu0 0.0
          %1318 = vmatprep.subr.mxu0 0.0
          %1319 = vmatpush2.msra.mxu0 0.0
          %1320 = vmatprep.subr.mxu0 0.0
          %1321 = vmatpush2.msra.mxu0 0.0
          %1322 = vmatprep.subr.mxu0 0.0
          %1323 = vmatpush2.msra.mxu0 0.0
          %1324 = vmatprep.subr.mxu0 0.0
          %1325 = vmatpush2.msra.mxu0 0.0
          %1326 = vmatprep.subr.mxu0 0.0
          %1327 = vmatpush2.msra.mxu0 0.0
          %1328 = vmatprep.subr.mxu0 0.0
          %1329 = vmatpush2.msra.mxu0 0.0
          %1330 = vmatprep.subr.mxu0 0.0
          %1331 = vmatpush2.msra.mxu0 0.0
          %1332 = vmatprep.subr.mxu0 0.0
          %1333 = vmatpush2.msra.mxu0 0.0
          %1334 = vmatprep.subr.mxu0 0.0
          %1335 = vmatpush2.msra.mxu0 0.0
          %1336 = vmatprep.subr.mxu0 0.0
          %1337 = vmatpush2.msra.mxu0 0.0
          %1338 = vmatprep.subr.mxu0 0.0
          %1339 = vmatpush2.msra.mxu0 0.0
          %1340 = vmatprep.subr.mxu0 0.0
          %1341 = vmatpush2.msra.mxu0 0.0
          %1342 = vmatprep.mubr.f32.mxu0 0.0
          %1343 = vmatmul.mubr.f32.gmra.mxu0 %v1260
          %v1344 = vpop.f32.mrf.mxu0
          %v1345 = vadd.f32 %v1277, %v1344
          %v1346 = vpop.f32.mrf.mxu0
          %1347 = vdwg.mxu0
          %vm1348 = vcmask 24576
          %1349 = vst.msk [vmem:[#allocation11] sm:$0x1] %vm1348, %v1345
        $region68: #{tpu_custom_call.1} parent=51 // pred_fallthru
          _
        %s1350 = sand.u32 %s233, 1
        %s1351 = scalar_lea.sflag [#allocation13], %s1350
        %s1352 = sand.u32 %s233, 1
        %s1353 = scalar_lea.vmem [#allocation12], %s1352
        // Predicated region
        $region69: #{tpu_custom_call.1} parent=51 // pred_check
          %p1354 = pneg %p217
        $region70: #{tpu_custom_call.1} parent=51 // pred_check_branch
          %1356 = sbr.rel (%p1354) target = $region72
        $region71: #{tpu_custom_call.1} parent=51 // pred_region
          %s1358 = ssub.s32 16, 16
          %1359 = vsyncadd [#allocation8], %s1358
          %s1361 = sshll.u32 [#allocation11], 4
          %s1362 = int_to_ptr.vmem [resolvable:$true] %s1361
          %1364 = dma.vmem_to_hbm [thread:$0]  %s1362, 16, %s8, [#allocation8]
        $region72: #{tpu_custom_call.1} parent=51 // pred_fallthru
          _
        // Predicated region
        $region73: #{tpu_custom_call.1} parent=51 // pred_check
          %p1365 = pneg %p243
        $region74: #{tpu_custom_call.1} parent=51 // pred_check_branch
          %1367 = sbr.rel (%p1365) target = $region76
        $region75: #{tpu_custom_call.1} parent=51 // pred_region
          %s1369 = ssub.s32 16, 16
          %1370 = vsyncadd %s1351, %s1369
          %s1371 = smul.addr %s31, 16
          %s1372 = scalar_lea.hbm %s9, %s1371
          %s1374 = sshll.u32 %s1353, 4
          %s1375 = int_to_ptr.vmem [resolvable:$true] %s1374
          %1377 = dma.vmem_to_hbm [thread:$0]  %s1375, 16, %s1372, %s1351
        $region76: #{tpu_custom_call.1} parent=51 // pred_fallthru
          _
        // Predicated region
        $region77: #{tpu_custom_call.1} parent=51 // pred_check
          %p1378 = pneg %p217
        $region78: #{tpu_custom_call.1} parent=51 // pred_check_branch
          %1380 = sbr.rel (%p1378) target = $region80
        $region79: #{tpu_custom_call.1} parent=51 // pred_region
          %1381 = dma.done [#allocation8], 16
        $region80: #{tpu_custom_call.1} parent=51 // pred_fallthru
          _
      $region52: #{tpu_custom_call.1} parent=5 // pred_fallthru
        _
      %p1382 = scmp.le.s32.totalorder 2, %s26
      // Predicated region
      $region81: #{tpu_custom_call.1} parent=5 // pred_check
        %p1383 = pneg %p1382
      $region82: #{tpu_custom_call.1} parent=5 // pred_check_branch
        %1385 = sbr.rel (%p1383) target = $region84
      $region83: #{tpu_custom_call.1} parent=5 // pred_region
        %s1386 = ssub.s32 %s26, 2
        // Predicated region
        $region85: #{tpu_custom_call.1} parent=83 // pred_check
          %p1387 = pneg %p249
        $region86: #{tpu_custom_call.1} parent=83 // pred_check_branch
          %1389 = sbr.rel (%p1387) target = $region88
        $region87: #{tpu_custom_call.1} parent=83 // pred_region
          %s1390 = sand.u32 %s234, 1
          %s1391 = scalar_lea.sflag [#allocation13], %s1390
          %s1392 = sand.u32 %s234, 1
          %s1393 = scalar_lea.vmem [#allocation12], %s1392
          %1394 = dma.done %s1391, 16
        $region88: #{tpu_custom_call.1} parent=83 // pred_fallthru
          _
      $region84: #{tpu_custom_call.1} parent=5 // pred_fallthru
        _
    $region6: #{tpu_custom_call.1} parent=1 // loop_footer
      %s30 = sadd.s32 1, %s26
    $region7: #{tpu_custom_call.1} parent=1 // loop_footer_branch
      %25 = sbr.rel target = $region3
    $region8: #{tpu_custom_call.1} parent=1 // loop_exit
      _
    %1395 = vsyncpa [#allocation7], 1
    %s1396 = scalar_lea.sflag [#allocation7], 1
    %1397 = vsyncpa %s1396, 1
    %1398 = vsyncpa [#allocation10], 1
    %1399 = vsyncpa [#allocation8], 1
    %s1400 = scalar_lea.sflag [#allocation8], 1
    %1401 = vsyncpa %s1400, 1
    %1402 = vsyncpa [#allocation13], 1
    %s1403 = scalar_lea.sflag [#allocation13], 1
    %1404 = vsyncpa %s1403, 1

</llo_original>
